<compile_context>
chip_gen: v6e
topology: v6e:2x2x1
jax: 0.10.0
libtpu: 0.0.40
codegen_flags: <defaults>
</compile_context>

<pallas_src>
import math
import numpy as np
import jax
import jax.numpy as jnp
from jax.experimental import pallas as pl
from jax.experimental.pallas import tpu as pltpu

# ---- synthetic config (small, consistent with the module's forward) --------
B, S, H = 2, 8, 32
BS = B * S
NUM_HEADS, HEAD_DIM = 2, 16
FF = 64
NUM_CLASSES = 5
VOCAB = 100
E1_ID = 90          # entity_one_start_token_id
E2_ID = 91          # entity_two_start_token_id
LN_EPS_BERT = 1e-12
LN_EPS_HEAD = 1e-5  # torch.nn.LayerNorm default

LANES = 128
OUT_ROWS = 8        # sublane-padded output rows (>= B)

# ---- packed parameter slab layout: one lane-dense (N_ROWS, 128) f32 --------
R_WQ = 0                              # per-head (H,128) blocks, cols 0:HEAD_DIM (pre-scaled)
R_WK = R_WQ + NUM_HEADS * H           # 64
R_WV = R_WK + NUM_HEADS * H           # 128
R_WO = R_WV + NUM_HEADS * H           # 192: per-head (128,128) blocks, rows 0:HEAD_DIM, cols 0:H
WO_ROWS = LANES
R_FF1 = R_WO + NUM_HEADS * WO_ROWS    # 448: (H,128), cols 0:FF
R_FF2 = R_FF1 + H                     # 480: (128,128), rows 0:FF, cols 0:H
FF2_ROWS = LANES
R_HEAD = R_FF2 + FF2_ROWS             # 608: (2H,128), cols 0:NUM_CLASSES
R_VEC = R_HEAD + 2 * H                # 672: per-row vectors
V_LN_EMB_G, V_LN_EMB_B = 0, 1
V_BQ, V_BK, V_BV = 2, 4, 6            # 2 rows each (per head), cols 0:HEAD_DIM
V_BO = 8
V_LN1_G, V_LN1_B = 9, 10
V_BFF1, V_BFF2 = 11, 12
V_LN2_G, V_LN2_B = 13, 14
V_HLN_G, V_HLN_B = 15, 16
V_HEAD_B = 17
VEC_ROWS = 24
N_ROWS = R_VEC + VEC_ROWS             # 696 (multiple of 8)

# activation slab layout: (2*BS, 256)
A_COLS = 256
A_MSEL = 128                          # entity-select block starts on a vreg boundary


# ---- shared math helpers (used both in-kernel and in the pure-JAX ref) -----
def _layernorm(x, g, b, eps):
    mean = jnp.mean(x, axis=-1, keepdims=True)
    var = jnp.mean((x - mean) ** 2, axis=-1, keepdims=True)
    return (x - mean) * jax.lax.rsqrt(var + eps) * g + b


def _gelu(x):
    c = math.sqrt(2.0 / math.pi)
    return 0.5 * x * (1.0 + jnp.tanh(c * (x + 0.044715 * x * x * x)))


# ---- fused Pallas kernel ----------------------------------------------------
def fused_kernel(a_ref, p_ref, out_ref):
    x = a_ref[0:BS, 0:H]                              # (BS, H) embeddings
    bias = a_ref[BS:2 * BS, 0:BS]                     # (BS, BS) block-diag + pad mask
    msel = a_ref[0:BS, A_MSEL:A_MSEL + 2 * H]         # (BS, 2H) entity-select multipliers

    def vrow(i, w=LANES):                             # packed bias/LN row (1, w)
        return p_ref[R_VEC + i:R_VEC + i + 1, 0:w]

    h = _layernorm(x, vrow(V_LN_EMB_G, H), vrow(V_LN_EMB_B, H), LN_EPS_BERT)

    # ---- multi-head self-attention (per-head 128-lane-aligned weight blocks)
    attn_out = jnp.zeros((BS, LANES), jnp.float32)
    for hd in range(NUM_HEADS):                       # NUM_HEADS=2, static unroll
        wq = p_ref[R_WQ + hd * H:R_WQ + (hd + 1) * H, :]        # (H,128), scaled
        wk = p_ref[R_WK + hd * H:R_WK + (hd + 1) * H, :]
        wv = p_ref[R_WV + hd * H:R_WV + (hd + 1) * H, :]
        wo = p_ref[R_WO + hd * WO_ROWS:R_WO + (hd + 1) * WO_ROWS, :]  # (128,128)
        qh = jnp.dot(h, wq, preferred_element_type=jnp.float32) + vrow(V_BQ + hd)
        kh = jnp.dot(h, wk, preferred_element_type=jnp.float32) + vrow(V_BK + hd)
        vh = jnp.dot(h, wv, preferred_element_type=jnp.float32) + vrow(V_BV + hd)
        s = jax.lax.dot_general(qh, kh, (((1,), (1,)), ((), ())),
                                preferred_element_type=jnp.float32) + bias  # (BS,BS)
        m = jnp.max(s, axis=-1, keepdims=True)
        e = jnp.exp(s - m)
        pr = e * pl.reciprocal(jnp.sum(e, axis=-1, keepdims=True), approx=True)
        ctx = jnp.dot(pr, vh, preferred_element_type=jnp.float32)           # (BS,128)
        attn_out = attn_out + jnp.dot(ctx, wo, preferred_element_type=jnp.float32)

    attn = attn_out[:, 0:H] + vrow(V_BO, H)
    h1 = _layernorm(h + attn, vrow(V_LN1_G, H), vrow(V_LN1_B, H), LN_EPS_BERT)

    # ---- FFN ----------------------------------------------------------------
    ffa = jnp.dot(h1, p_ref[R_FF1:R_FF1 + H, :],
                  preferred_element_type=jnp.float32) + vrow(V_BFF1)
    ffa = _gelu(ffa)                                   # padded lanes stay 0
    ffb = jnp.dot(ffa, p_ref[R_FF2:R_FF2 + FF2_ROWS, :],
                  preferred_element_type=jnp.float32)
    ff = ffb[:, 0:H] + vrow(V_BFF2, H)
    hidden = _layernorm(h1 + ff, vrow(V_LN2_G, H), vrow(V_LN2_B, H), LN_EPS_BERT)

    # ---- relationship head: fused entity pooling (VPU multiply + sublane sums)
    w2 = jnp.concatenate([hidden, hidden], axis=1) * msel                   # (BS, 2H)
    rows = [jnp.sum(w2[b * S:(b + 1) * S, :], axis=0, keepdims=True) for b in range(B)]
    rows.append(jnp.zeros((OUT_ROWS - B, 2 * H), jnp.float32))
    rel = jnp.concatenate(rows, axis=0)                                     # (8, 2H)

    norm = _layernorm(rel, vrow(V_HLN_G, 2 * H), vrow(V_HLN_B, 2 * H), LN_EPS_HEAD)
    out_ref[...] = jnp.dot(norm, p_ref[R_HEAD:R_HEAD + 2 * H, :],
                           preferred_element_type=jnp.float32) + vrow(V_HEAD_B)


# ---- parameter packing (done once) ------------------------------------------
def pack_params(p):
    assert NUM_HEADS * HEAD_DIM == H
    assert max(H, FF, 2 * H, NUM_CLASSES) <= LANES
    assert B <= OUT_ROWS
    scale = 1.0 / math.sqrt(HEAD_DIM)
    ps = jnp.zeros((N_ROWS, LANES), jnp.float32)
    for hd in range(NUM_HEADS):
        c0, c1 = hd * HEAD_DIM, (hd + 1) * HEAD_DIM
        ps = ps.at[R_WQ + hd * H:R_WQ + (hd + 1) * H, 0:HEAD_DIM].set(p['wq'][:, c0:c1] * scale)
        ps = ps.at[R_WK + hd * H:R_WK + (hd + 1) * H, 0:HEAD_DIM].set(p['wk'][:, c0:c1])
        ps = ps.at[R_WV + hd * H:R_WV + (hd + 1) * H, 0:HEAD_DIM].set(p['wv'][:, c0:c1])
        ps = ps.at[R_WO + hd * WO_ROWS:R_WO + hd * WO_ROWS + HEAD_DIM, 0:H].set(p['wo'][c0:c1, :])
        ps = ps.at[R_VEC + V_BQ + hd, 0:HEAD_DIM].set(p['bq'][0, c0:c1] * scale)
        ps = ps.at[R_VEC + V_BK + hd, 0:HEAD_DIM].set(p['bk'][0, c0:c1])
        ps = ps.at[R_VEC + V_BV + hd, 0:HEAD_DIM].set(p['bv'][0, c0:c1])
    ps = ps.at[R_FF1:R_FF1 + H, 0:FF].set(p['w_ff1'])
    ps = ps.at[R_FF2:R_FF2 + FF, 0:H].set(p['w_ff2'])
    ps = ps.at[R_HEAD:R_HEAD + 2 * H, 0:NUM_CLASSES].set(p['head_w'])
    ps = ps.at[R_VEC + V_LN_EMB_G, 0:H].set(p['ln_emb_g'][0])
    ps = ps.at[R_VEC + V_LN_EMB_B, 0:H].set(p['ln_emb_b'][0])
    ps = ps.at[R_VEC + V_BO, 0:H].set(p['bo'][0])
    ps = ps.at[R_VEC + V_LN1_G, 0:H].set(p['ln1_g'][0])
    ps = ps.at[R_VEC + V_LN1_B, 0:H].set(p['ln1_b'][0])
    ps = ps.at[R_VEC + V_BFF1, 0:FF].set(p['b_ff1'][0])
    ps = ps.at[R_VEC + V_BFF2, 0:H].set(p['b_ff2'][0])
    ps = ps.at[R_VEC + V_LN2_G, 0:H].set(p['ln2_g'][0])
    ps = ps.at[R_VEC + V_LN2_B, 0:H].set(p['ln2_b'][0])
    ps = ps.at[R_VEC + V_HLN_G, 0:2 * H].set(p['head_ln_g'][0])
    ps = ps.at[R_VEC + V_HLN_B, 0:2 * H].set(p['head_ln_b'][0])
    ps = ps.at[R_VEC + V_HEAD_B, 0:NUM_CLASSES].set(p['head_b'][0])
    return dict(word_emb=p['word_emb'], pos_emb=p['pos_emb'], pslab=ps)


# ---- wrapper: one gridless pallas_call --------------------------------------
@jax.jit
def relationship_encoder_forward(token_ids, attention_mask, pk):
    # plain-JAX glue: embedding gather + position embeddings (layout plumbing)
    x = (pk['word_emb'][token_ids] + pk['pos_emb'][None, :, :]).astype(jnp.float32)
    x_flat = x.reshape(BS, H)

    # block-diagonal batch structure + padding mask as one additive bias
    mask_f = attention_mask.astype(jnp.float32).reshape(BS)
    batch_ids = jnp.arange(BS, dtype=jnp.int32) // S
    same_batch = batch_ids[:, None] == batch_ids[None, :]
    allowed = same_batch & (mask_f[None, :] > 0.5)
    attn_bias = jnp.where(allowed, 0.0, -1e9).astype(jnp.float32)       # (BS, BS)

    # entity-select multipliers, pre-broadcast over hidden lanes:
    # cols 0:H -> entity-one mask, cols H:2H -> entity-two mask
    m1 = (token_ids == E1_ID).astype(jnp.float32).reshape(BS, 1)
    m2 = (token_ids == E2_ID).astype(jnp.float32).reshape(BS, 1)
    msel = jnp.concatenate([jnp.broadcast_to(m1, (BS, H)),
                            jnp.broadcast_to(m2, (BS, H))], axis=1)     # (BS, 2H)

    # single lane-dense activation slab (one DMA)
    aslab = jnp.zeros((2 * BS, A_COLS), jnp.float32)
    aslab = aslab.at[0:BS, 0:H].set(x_flat)
    aslab = aslab.at[0:BS, A_MSEL:A_MSEL + 2 * H].set(msel)
    aslab = aslab.at[BS:2 * BS, 0:BS].set(attn_bias)

    out = pl.pallas_call(
        fused_kernel,
        out_shape=jax.ShapeDtypeStruct((OUT_ROWS, LANES), jnp.float32),
        in_specs=[pl.BlockSpec(memory_space=pltpu.MemorySpace.VMEM),
                  pl.BlockSpec(memory_space=pltpu.MemorySpace.VMEM)],
        out_specs=pl.BlockSpec(memory_space=pltpu.MemorySpace.VMEM),
    )(aslab, pk['pslab'])
    return out[:B, :NUM_CLASSES]


# ---- pure-JAX reference (same math, no Pallas, unpacked params) -------------
def reference_forward(token_ids, attention_mask, p):
    x = p['word_emb'][token_ids] + p['pos_emb'][None, :, :]
    h = _layernorm(x, p['ln_emb_g'], p['ln_emb_b'], LN_EPS_BERT)
    q = jnp.einsum('bsh,hk->bsk', h, p['wq']) + p['bq']
    k = jnp.einsum('bsh,hk->bsk', h, p['wk']) + p['bk']
    v = jnp.einsum('bsh,hk->bsk', h, p['wv']) + p['bv']
    qh = q.reshape(B, S, NUM_HEADS, HEAD_DIM)
    kh = k.reshape(B, S, NUM_HEADS, HEAD_DIM)
    vh = v.reshape(B, S, NUM_HEADS, HEAD_DIM)
    scores = jnp.einsum('bqnd,bknd->bnqk', qh, kh) / math.sqrt(HEAD_DIM)
    bias = (1.0 - attention_mask.astype(jnp.float32)) * (-1e9)
    scores = scores + bias[:, None, None, :]
    probs = jax.nn.softmax(scores, axis=-1)
    ctx = jnp.einsum('bnqk,bknd->bqnd', probs, vh).reshape(B, S, H)
    attn_out = jnp.einsum('bsh,hk->bsk', ctx, p['wo']) + p['bo']
    h1 = _layernorm(h + attn_out, p['ln1_g'], p['ln1_b'], LN_EPS_BERT)
    ff = _gelu(jnp.einsum('bsh,hf->bsf', h1, p['w_ff1']) + p['b_ff1'])
    ff = jnp.einsum('bsf,fh->bsh', ff, p['w_ff2']) + p['b_ff2']
    hidden = _layernorm(h1 + ff, p['ln2_g'], p['ln2_b'], LN_EPS_BERT)
    m1 = (token_ids == E1_ID).astype(jnp.float32)
    m2 = (token_ids == E2_ID).astype(jnp.float32)
    e1 = jnp.einsum('bs,bsh->bh', m1, hidden)
    e2 = jnp.einsum('bs,bsh->bh', m2, hidden)
    rel = jnp.concatenate([e1, e2], axis=1)
    norm = _layernorm(rel, p['head_ln_g'], p['head_ln_b'], LN_EPS_HEAD)
    return norm @ p['head_w'] + p['head_b']


# ---- deterministic parameter init -------------------------------------------
def init_params(key):
    keys = jax.random.split(key, 9)
    scale = 0.02

    def nrm(k, shape):
        return (scale * jax.random.normal(k, shape)).astype(jnp.float32)

    ones = lambda shape: jnp.ones(shape, jnp.float32)
    zeros = lambda shape: jnp.zeros(shape, jnp.float32)
    return dict(
        word_emb=nrm(keys[0], (VOCAB, H)),
        pos_emb=nrm(keys[1], (S, H)),
        ln_emb_g=ones((1, H)), ln_emb_b=zeros((1, H)),
        wq=nrm(keys[2], (H, H)), bq=zeros((1, H)),
        wk=nrm(keys[3], (H, H)), bk=zeros((1, H)),
        wv=nrm(keys[4], (H, H)), bv=zeros((1, H)),
        wo=nrm(keys[5], (H, H)), bo=zeros((1, H)),
        ln1_g=ones((1, H)), ln1_b=zeros((1, H)),
        w_ff1=nrm(keys[6], (H, FF)), b_ff1=zeros((1, FF)),
        w_ff2=nrm(keys[7], (FF, H)), b_ff2=zeros((1, H)),
        ln2_g=ones((1, H)), ln2_b=zeros((1, H)),
        head_ln_g=ones((1, 2 * H)), head_ln_b=zeros((1, 2 * H)),
        head_w=nrm(keys[8], (2 * H, NUM_CLASSES)), head_b=zeros((1, NUM_CLASSES)),
    )


if __name__ == "__main__":
    key = jax.random.PRNGKey(0)
    pkey, tkey = jax.random.split(key)
    params = init_params(pkey)
    packed = pack_params(params)

    token_ids = jax.random.randint(tkey, (B, S), 0, VOCAB - 10, dtype=jnp.int32)
    token_ids = token_ids.at[:, 1].set(E1_ID)   # entity-one start markers
    token_ids = token_ids.at[:, 4].set(E2_ID)   # entity-two start markers
    attention_mask = jnp.ones((B, S), dtype=jnp.int32).at[1, S - 1].set(0)

    logits = relationship_encoder_forward(token_ids, attention_mask, packed)
    logits = jax.block_until_ready(logits)

    assert logits.shape == (B, NUM_CLASSES)
    ref = reference_forward(token_ids, attention_mask, params)
    # tolerance slightly relaxed for the EUP approx-reciprocal softmax denom
    np.testing.assert_allclose(np.asarray(logits), np.asarray(ref),
                               rtol=2e-3, atol=2e-3)
    print("KERNEL_OK")
</pallas_src>

<mosaic_0001>
module attributes {stable_mosaic.version = 11 : i64} {
  func.func @fused_kernel(%arg0: memref<32x256xf32, #tpu.memory_space<vmem>>, %arg1: memref<696x128xf32, #tpu.memory_space<vmem>>, %arg2: memref<8x128xf32, #tpu.memory_space<vmem>>) attributes {dimension_semantics = [], scalar_prefetch = 0 : i64, scratch_operands = 0 : i64, tpu.core_type = #tpu.core_type<tc>} {
    %c0 = arith.constant 0 : index
    %c0_0 = arith.constant 0 : index
    %0 = vector.load %arg0[%c0, %c0_0] : memref<32x256xf32, #tpu.memory_space<vmem>>, vector<16x32xf32>
    %c16 = arith.constant 16 : index
    %c0_1 = arith.constant 0 : index
    %1 = vector.load %arg0[%c16, %c0_1] : memref<32x256xf32, #tpu.memory_space<vmem>>, vector<16x16xf32>
    %c0_2 = arith.constant 0 : index
    %c128 = arith.constant 128 : index
    %2 = vector.load %arg0[%c0_2, %c128] : memref<32x256xf32, #tpu.memory_space<vmem>>, vector<16x64xf32>
    %c672 = arith.constant 672 : index
    %c0_3 = arith.constant 0 : index
    %3 = vector.load %arg1[%c672, %c0_3] : memref<696x128xf32, #tpu.memory_space<vmem>>, vector<1x32xf32>
    %c673 = arith.constant 673 : index
    %c0_4 = arith.constant 0 : index
    %4 = vector.load %arg1[%c673, %c0_4] : memref<696x128xf32, #tpu.memory_space<vmem>>, vector<1x32xf32>
    %cst = arith.constant dense<0.000000e+00> : vector<16xf32>
    %5 = vector.multi_reduction <add>, %0, %cst [1] : vector<16x32xf32> to vector<16xf32>
    %6 = vector.shape_cast %5 : vector<16xf32> to vector<16x1xf32>
    %cst_5 = arith.constant 3.200000e+01 : f32
    %7 = vector.broadcast %cst_5 : f32 to vector<16x1xf32>
    %8 = arith.divf %6, %7 : vector<16x1xf32>
    %9 = vector.broadcast %8 : vector<16x1xf32> to vector<16x32xf32>
    %10 = arith.subf %0, %9 : vector<16x32xf32>
    %11 = arith.mulf %10, %10 : vector<16x32xf32>
    %cst_6 = arith.constant dense<0.000000e+00> : vector<16xf32>
    %12 = vector.multi_reduction <add>, %11, %cst_6 [1] : vector<16x32xf32> to vector<16xf32>
    %13 = vector.shape_cast %12 : vector<16xf32> to vector<16x1xf32>
    %cst_7 = arith.constant 3.200000e+01 : f32
    %14 = vector.broadcast %cst_7 : f32 to vector<16x1xf32>
    %15 = arith.divf %13, %14 : vector<16x1xf32>
    %16 = vector.broadcast %8 : vector<16x1xf32> to vector<16x32xf32>
    %17 = arith.subf %0, %16 : vector<16x32xf32>
    %cst_8 = arith.constant 9.99999996E-13 : f32
    %18 = vector.broadcast %cst_8 : f32 to vector<16x1xf32>
    %19 = arith.addf %15, %18 : vector<16x1xf32>
    %20 = math.rsqrt %19 : vector<16x1xf32>
    %21 = vector.broadcast %20 : vector<16x1xf32> to vector<16x32xf32>
    %22 = arith.mulf %17, %21 : vector<16x32xf32>
    %23 = vector.broadcast %3 : vector<1x32xf32> to vector<16x32xf32>
    %24 = arith.mulf %22, %23 : vector<16x32xf32>
    %25 = vector.broadcast %4 : vector<1x32xf32> to vector<16x32xf32>
    %26 = arith.addf %24, %25 : vector<16x32xf32>
    %cst_9 = arith.constant 0.000000e+00 : f32
    %27 = vector.broadcast %cst_9 : f32 to vector<16x128xf32>
    %c0_10 = arith.constant 0 : index
    %c0_11 = arith.constant 0 : index
    %28 = vector.load %arg1[%c0_10, %c0_11] : memref<696x128xf32, #tpu.memory_space<vmem>>, vector<32x128xf32>
    %c64 = arith.constant 64 : index
    %c0_12 = arith.constant 0 : index
    %29 = vector.load %arg1[%c64, %c0_12] : memref<696x128xf32, #tpu.memory_space<vmem>>, vector<32x128xf32>
    %c128_13 = arith.constant 128 : index
    %c0_14 = arith.constant 0 : index
    %30 = vector.load %arg1[%c128_13, %c0_14] : memref<696x128xf32, #tpu.memory_space<vmem>>, vector<32x128xf32>
    %c192 = arith.constant 192 : index
    %c0_15 = arith.constant 0 : index
    %31 = vector.load %arg1[%c192, %c0_15] : memref<696x128xf32, #tpu.memory_space<vmem>>, vector<128x128xf32>
    %cst_16 = arith.constant dense<0.000000e+00> : vector<16x128xf32>
    %32 = tpu.matmul %26, %28, %cst_16 {dimension_numbers = #tpu.dot_dimension_numbers<[1], [0], [0], [1], [0, 0, 1, 1], [], []>} : vector<16x32xf32>, vector<32x128xf32>, vector<16x128xf32> -> vector<16x128xf32>
    %c674 = arith.constant 674 : index
    %c0_17 = arith.constant 0 : index
    %33 = vector.load %arg1[%c674, %c0_17] : memref<696x128xf32, #tpu.memory_space<vmem>>, vector<1x128xf32>
    %34 = vector.broadcast %33 : vector<1x128xf32> to vector<16x128xf32>
    %35 = arith.addf %32, %34 : vector<16x128xf32>
    %cst_18 = arith.constant dense<0.000000e+00> : vector<16x128xf32>
    %36 = tpu.matmul %26, %29, %cst_18 {dimension_numbers = #tpu.dot_dimension_numbers<[1], [0], [0], [1], [0, 0, 1, 1], [], []>} : vector<16x32xf32>, vector<32x128xf32>, vector<16x128xf32> -> vector<16x128xf32>
    %c676 = arith.constant 676 : index
    %c0_19 = arith.constant 0 : index
    %37 = vector.load %arg1[%c676, %c0_19] : memref<696x128xf32, #tpu.memory_space<vmem>>, vector<1x128xf32>
    %38 = vector.broadcast %37 : vector<1x128xf32> to vector<16x128xf32>
    %39 = arith.addf %36, %38 : vector<16x128xf32>
    %cst_20 = arith.constant dense<0.000000e+00> : vector<16x128xf32>
    %40 = tpu.matmul %26, %30, %cst_20 {dimension_numbers = #tpu.dot_dimension_numbers<[1], [0], [0], [1], [0, 0, 1, 1], [], []>} : vector<16x32xf32>, vector<32x128xf32>, vector<16x128xf32> -> vector<16x128xf32>
    %c678 = arith.constant 678 : index
    %c0_21 = arith.constant 0 : index
    %41 = vector.load %arg1[%c678, %c0_21] : memref<696x128xf32, #tpu.memory_space<vmem>>, vector<1x128xf32>
    %42 = vector.broadcast %41 : vector<1x128xf32> to vector<16x128xf32>
    %43 = arith.addf %40, %42 : vector<16x128xf32>
    %cst_22 = arith.constant dense<0.000000e+00> : vector<16x16xf32>
    %44 = tpu.matmul %35, %39, %cst_22 {dimension_numbers = #tpu.dot_dimension_numbers<[1], [1], [0], [0], [0, 0, 1, 0], [], []>} : vector<16x128xf32>, vector<16x128xf32>, vector<16x16xf32> -> vector<16x16xf32>
    %45 = arith.addf %44, %1 : vector<16x16xf32>
    %cst_23 = arith.constant dense<0xFF800000> : vector<16xf32>
    %46 = vector.multi_reduction <maximumf>, %45, %cst_23 [1] : vector<16x16xf32> to vector<16xf32>
    %47 = vector.shape_cast %46 : vector<16xf32> to vector<16x1xf32>
    %48 = vector.broadcast %47 : vector<16x1xf32> to vector<16x16xf32>
    %49 = arith.subf %45, %48 : vector<16x16xf32>
    %50 = math.exp %49 : vector<16x16xf32>
    %cst_24 = arith.constant dense<0.000000e+00> : vector<16xf32>
    %51 = vector.multi_reduction <add>, %50, %cst_24 [1] : vector<16x16xf32> to vector<16xf32>
    %52 = vector.shape_cast %51 : vector<16xf32> to vector<16x1xf32>
    %53 = tpu.reciprocal %52 {approx = true} : vector<16x1xf32> -> vector<16x1xf32>
    %54 = vector.broadcast %53 : vector<16x1xf32> to vector<16x16xf32>
    %55 = arith.mulf %50, %54 : vector<16x16xf32>
    %cst_25 = arith.constant dense<0.000000e+00> : vector<16x128xf32>
    %56 = tpu.matmul %55, %43, %cst_25 {dimension_numbers = #tpu.dot_dimension_numbers<[1], [0], [0], [1], [0, 0, 1, 1], [], []>} : vector<16x16xf32>, vector<16x128xf32>, vector<16x128xf32> -> vector<16x128xf32>
    %cst_26 = arith.constant dense<0.000000e+00> : vector<16x128xf32>
    %57 = tpu.matmul %56, %31, %cst_26 {dimension_numbers = #tpu.dot_dimension_numbers<[1], [0], [0], [1], [0, 0, 1, 1], [], []>} : vector<16x128xf32>, vector<128x128xf32>, vector<16x128xf32> -> vector<16x128xf32>
    %58 = arith.addf %27, %57 : vector<16x128xf32>
    %c32 = arith.constant 32 : index
    %c0_27 = arith.constant 0 : index
    %59 = vector.load %arg1[%c32, %c0_27] : memref<696x128xf32, #tpu.memory_space<vmem>>, vector<32x128xf32>
    %c96 = arith.constant 96 : index
    %c0_28 = arith.constant 0 : index
    %60 = vector.load %arg1[%c96, %c0_28] : memref<696x128xf32, #tpu.memory_space<vmem>>, vector<32x128xf32>
    %c160 = arith.constant 160 : index
    %c0_29 = arith.constant 0 : index
    %61 = vector.load %arg1[%c160, %c0_29] : memref<696x128xf32, #tpu.memory_space<vmem>>, vector<32x128xf32>
    %c320 = arith.constant 320 : index
    %c0_30 = arith.constant 0 : index
    %62 = vector.load %arg1[%c320, %c0_30] : memref<696x128xf32, #tpu.memory_space<vmem>>, vector<128x128xf32>
    %cst_31 = arith.constant dense<0.000000e+00> : vector<16x128xf32>
    %63 = tpu.matmul %26, %59, %cst_31 {dimension_numbers = #tpu.dot_dimension_numbers<[1], [0], [0], [1], [0, 0, 1, 1], [], []>} : vector<16x32xf32>, vector<32x128xf32>, vector<16x128xf32> -> vector<16x128xf32>
    %c675 = arith.constant 675 : index
    %c0_32 = arith.constant 0 : index
    %64 = vector.load %arg1[%c675, %c0_32] : memref<696x128xf32, #tpu.memory_space<vmem>>, vector<1x128xf32>
    %65 = vector.broadcast %64 : vector<1x128xf32> to vector<16x128xf32>
    %66 = arith.addf %63, %65 : vector<16x128xf32>
    %cst_33 = arith.constant dense<0.000000e+00> : vector<16x128xf32>
    %67 = tpu.matmul %26, %60, %cst_33 {dimension_numbers = #tpu.dot_dimension_numbers<[1], [0], [0], [1], [0, 0, 1, 1], [], []>} : vector<16x32xf32>, vector<32x128xf32>, vector<16x128xf32> -> vector<16x128xf32>
    %c677 = arith.constant 677 : index
    %c0_34 = arith.constant 0 : index
    %68 = vector.load %arg1[%c677, %c0_34] : memref<696x128xf32, #tpu.memory_space<vmem>>, vector<1x128xf32>
    %69 = vector.broadcast %68 : vector<1x128xf32> to vector<16x128xf32>
    %70 = arith.addf %67, %69 : vector<16x128xf32>
    %cst_35 = arith.constant dense<0.000000e+00> : vector<16x128xf32>
    %71 = tpu.matmul %26, %61, %cst_35 {dimension_numbers = #tpu.dot_dimension_numbers<[1], [0], [0], [1], [0, 0, 1, 1], [], []>} : vector<16x32xf32>, vector<32x128xf32>, vector<16x128xf32> -> vector<16x128xf32>
    %c679 = arith.constant 679 : index
    %c0_36 = arith.constant 0 : index
    %72 = vector.load %arg1[%c679, %c0_36] : memref<696x128xf32, #tpu.memory_space<vmem>>, vector<1x128xf32>
    %73 = vector.broadcast %72 : vector<1x128xf32> to vector<16x128xf32>
    %74 = arith.addf %71, %73 : vector<16x128xf32>
    %cst_37 = arith.constant dense<0.000000e+00> : vector<16x16xf32>
    %75 = tpu.matmul %66, %70, %cst_37 {dimension_numbers = #tpu.dot_dimension_numbers<[1], [1], [0], [0], [0, 0, 1, 0], [], []>} : vector<16x128xf32>, vector<16x128xf32>, vector<16x16xf32> -> vector<16x16xf32>
    %76 = arith.addf %75, %1 : vector<16x16xf32>
    %cst_38 = arith.constant dense<0xFF800000> : vector<16xf32>
    %77 = vector.multi_reduction <maximumf>, %76, %cst_38 [1] : vector<16x16xf32> to vector<16xf32>
    %78 = vector.shape_cast %77 : vector<16xf32> to vector<16x1xf32>
    %79 = vector.broadcast %78 : vector<16x1xf32> to vector<16x16xf32>
    %80 = arith.subf %76, %79 : vector<16x16xf32>
    %81 = math.exp %80 : vector<16x16xf32>
    %cst_39 = arith.constant dense<0.000000e+00> : vector<16xf32>
    %82 = vector.multi_reduction <add>, %81, %cst_39 [1] : vector<16x16xf32> to vector<16xf32>
    %83 = vector.shape_cast %82 : vector<16xf32> to vector<16x1xf32>
    %84 = tpu.reciprocal %83 {approx = true} : vector<16x1xf32> -> vector<16x1xf32>
    %85 = vector.broadcast %84 : vector<16x1xf32> to vector<16x16xf32>
    %86 = arith.mulf %81, %85 : vector<16x16xf32>
    %cst_40 = arith.constant dense<0.000000e+00> : vector<16x128xf32>
    %87 = tpu.matmul %86, %74, %cst_40 {dimension_numbers = #tpu.dot_dimension_numbers<[1], [0], [0], [1], [0, 0, 1, 1], [], []>} : vector<16x16xf32>, vector<16x128xf32>, vector<16x128xf32> -> vector<16x128xf32>
    %cst_41 = arith.constant dense<0.000000e+00> : vector<16x128xf32>
    %88 = tpu.matmul %87, %62, %cst_41 {dimension_numbers = #tpu.dot_dimension_numbers<[1], [0], [0], [1], [0, 0, 1, 1], [], []>} : vector<16x128xf32>, vector<128x128xf32>, vector<16x128xf32> -> vector<16x128xf32>
    %89 = arith.addf %58, %88 : vector<16x128xf32>
    %90 = vector.extract_strided_slice %89 {offsets = [0, 0], sizes = [16, 32], strides = [1, 1]} : vector<16x128xf32> to vector<16x32xf32>
    %c680 = arith.constant 680 : index
    %c0_42 = arith.constant 0 : index
    %91 = vector.load %arg1[%c680, %c0_42] : memref<696x128xf32, #tpu.memory_space<vmem>>, vector<1x32xf32>
    %92 = vector.broadcast %91 : vector<1x32xf32> to vector<16x32xf32>
    %93 = arith.addf %90, %92 : vector<16x32xf32>
    %94 = arith.addf %26, %93 : vector<16x32xf32>
    %c681 = arith.constant 681 : index
    %c0_43 = arith.constant 0 : index
    %95 = vector.load %arg1[%c681, %c0_43] : memref<696x128xf32, #tpu.memory_space<vmem>>, vector<1x32xf32>
    %c682 = arith.constant 682 : index
    %c0_44 = arith.constant 0 : index
    %96 = vector.load %arg1[%c682, %c0_44] : memref<696x128xf32, #tpu.memory_space<vmem>>, vector<1x32xf32>
    %cst_45 = arith.constant dense<0.000000e+00> : vector<16xf32>
    %97 = vector.multi_reduction <add>, %94, %cst_45 [1] : vector<16x32xf32> to vector<16xf32>
    %98 = vector.shape_cast %97 : vector<16xf32> to vector<16x1xf32>
    %cst_46 = arith.constant 3.200000e+01 : f32
    %99 = vector.broadcast %cst_46 : f32 to vector<16x1xf32>
    %100 = arith.divf %98, %99 : vector<16x1xf32>
    %101 = vector.broadcast %100 : vector<16x1xf32> to vector<16x32xf32>
    %102 = arith.subf %94, %101 : vector<16x32xf32>
    %103 = arith.mulf %102, %102 : vector<16x32xf32>
    %cst_47 = arith.constant dense<0.000000e+00> : vector<16xf32>
    %104 = vector.multi_reduction <add>, %103, %cst_47 [1] : vector<16x32xf32> to vector<16xf32>
    %105 = vector.shape_cast %104 : vector<16xf32> to vector<16x1xf32>
    %cst_48 = arith.constant 3.200000e+01 : f32
    %106 = vector.broadcast %cst_48 : f32 to vector<16x1xf32>
    %107 = arith.divf %105, %106 : vector<16x1xf32>
    %108 = vector.broadcast %100 : vector<16x1xf32> to vector<16x32xf32>
    %109 = arith.subf %94, %108 : vector<16x32xf32>
    %cst_49 = arith.constant 9.99999996E-13 : f32
    %110 = vector.broadcast %cst_49 : f32 to vector<16x1xf32>
    %111 = arith.addf %107, %110 : vector<16x1xf32>
    %112 = math.rsqrt %111 : vector<16x1xf32>
    %113 = vector.broadcast %112 : vector<16x1xf32> to vector<16x32xf32>
    %114 = arith.mulf %109, %113 : vector<16x32xf32>
    %115 = vector.broadcast %95 : vector<1x32xf32> to vector<16x32xf32>
    %116 = arith.mulf %114, %115 : vector<16x32xf32>
    %117 = vector.broadcast %96 : vector<1x32xf32> to vector<16x32xf32>
    %118 = arith.addf %116, %117 : vector<16x32xf32>
    %c448 = arith.constant 448 : index
    %c0_50 = arith.constant 0 : index
    %119 = vector.load %arg1[%c448, %c0_50] : memref<696x128xf32, #tpu.memory_space<vmem>>, vector<32x128xf32>
    %cst_51 = arith.constant dense<0.000000e+00> : vector<16x128xf32>
    %120 = tpu.matmul %118, %119, %cst_51 {dimension_numbers = #tpu.dot_dimension_numbers<[1], [0], [0], [1], [0, 0, 1, 1], [], []>} : vector<16x32xf32>, vector<32x128xf32>, vector<16x128xf32> -> vector<16x128xf32>
    %c683 = arith.constant 683 : index
    %c0_52 = arith.constant 0 : index
    %121 = vector.load %arg1[%c683, %c0_52] : memref<696x128xf32, #tpu.memory_space<vmem>>, vector<1x128xf32>
    %122 = vector.broadcast %121 : vector<1x128xf32> to vector<16x128xf32>
    %123 = arith.addf %120, %122 : vector<16x128xf32>
    %cst_53 = arith.constant 5.000000e-01 : f32
    %124 = vector.broadcast %cst_53 : f32 to vector<16x128xf32>
    %125 = arith.mulf %124, %123 : vector<16x128xf32>
    %cst_54 = arith.constant 4.471500e-02 : f32
    %126 = vector.broadcast %cst_54 : f32 to vector<16x128xf32>
    %127 = arith.mulf %126, %123 : vector<16x128xf32>
    %128 = arith.mulf %127, %123 : vector<16x128xf32>
    %129 = arith.mulf %128, %123 : vector<16x128xf32>
    %130 = arith.addf %123, %129 : vector<16x128xf32>
    %cst_55 = arith.constant 0.797884583 : f32
    %131 = vector.broadcast %cst_55 : f32 to vector<16x128xf32>
    %132 = arith.mulf %131, %130 : vector<16x128xf32>
    %133 = math.tanh %132 : vector<16x128xf32>
    %cst_56 = arith.constant 1.000000e+00 : f32
    %134 = vector.broadcast %cst_56 : f32 to vector<16x128xf32>
    %135 = arith.addf %134, %133 : vector<16x128xf32>
    %136 = arith.mulf %125, %135 : vector<16x128xf32>
    %c480 = arith.constant 480 : index
    %c0_57 = arith.constant 0 : index
    %137 = vector.load %arg1[%c480, %c0_57] : memref<696x128xf32, #tpu.memory_space<vmem>>, vector<128x128xf32>
    %cst_58 = arith.constant dense<0.000000e+00> : vector<16x128xf32>
    %138 = tpu.matmul %136, %137, %cst_58 {dimension_numbers = #tpu.dot_dimension_numbers<[1], [0], [0], [1], [0, 0, 1, 1], [], []>} : vector<16x128xf32>, vector<128x128xf32>, vector<16x128xf32> -> vector<16x128xf32>
    %139 = vector.extract_strided_slice %138 {offsets = [0, 0], sizes = [16, 32], strides = [1, 1]} : vector<16x128xf32> to vector<16x32xf32>
    %c684 = arith.constant 684 : index
    %c0_59 = arith.constant 0 : index
    %140 = vector.load %arg1[%c684, %c0_59] : memref<696x128xf32, #tpu.memory_space<vmem>>, vector<1x32xf32>
    %141 = vector.broadcast %140 : vector<1x32xf32> to vector<16x32xf32>
    %142 = arith.addf %139, %141 : vector<16x32xf32>
    %143 = arith.addf %118, %142 : vector<16x32xf32>
    %c685 = arith.constant 685 : index
    %c0_60 = arith.constant 0 : index
    %144 = vector.load %arg1[%c685, %c0_60] : memref<696x128xf32, #tpu.memory_space<vmem>>, vector<1x32xf32>
    %c686 = arith.constant 686 : index
    %c0_61 = arith.constant 0 : index
    %145 = vector.load %arg1[%c686, %c0_61] : memref<696x128xf32, #tpu.memory_space<vmem>>, vector<1x32xf32>
    %cst_62 = arith.constant dense<0.000000e+00> : vector<16xf32>
    %146 = vector.multi_reduction <add>, %143, %cst_62 [1] : vector<16x32xf32> to vector<16xf32>
    %147 = vector.shape_cast %146 : vector<16xf32> to vector<16x1xf32>
    %cst_63 = arith.constant 3.200000e+01 : f32
    %148 = vector.broadcast %cst_63 : f32 to vector<16x1xf32>
    %149 = arith.divf %147, %148 : vector<16x1xf32>
    %150 = vector.broadcast %149 : vector<16x1xf32> to vector<16x32xf32>
    %151 = arith.subf %143, %150 : vector<16x32xf32>
    %152 = arith.mulf %151, %151 : vector<16x32xf32>
    %cst_64 = arith.constant dense<0.000000e+00> : vector<16xf32>
    %153 = vector.multi_reduction <add>, %152, %cst_64 [1] : vector<16x32xf32> to vector<16xf32>
    %154 = vector.shape_cast %153 : vector<16xf32> to vector<16x1xf32>
    %cst_65 = arith.constant 3.200000e+01 : f32
    %155 = vector.broadcast %cst_65 : f32 to vector<16x1xf32>
    %156 = arith.divf %154, %155 : vector<16x1xf32>
    %157 = vector.broadcast %149 : vector<16x1xf32> to vector<16x32xf32>
    %158 = arith.subf %143, %157 : vector<16x32xf32>
    %cst_66 = arith.constant 9.99999996E-13 : f32
    %159 = vector.broadcast %cst_66 : f32 to vector<16x1xf32>
    %160 = arith.addf %156, %159 : vector<16x1xf32>
    %161 = math.rsqrt %160 : vector<16x1xf32>
    %162 = vector.broadcast %161 : vector<16x1xf32> to vector<16x32xf32>
    %163 = arith.mulf %158, %162 : vector<16x32xf32>
    %164 = vector.broadcast %144 : vector<1x32xf32> to vector<16x32xf32>
    %165 = arith.mulf %163, %164 : vector<16x32xf32>
    %166 = vector.broadcast %145 : vector<1x32xf32> to vector<16x32xf32>
    %167 = arith.addf %165, %166 : vector<16x32xf32>
    %168 = tpu.concatenate %167, %167 in 1 : vector<16x32xf32>, vector<16x32xf32> -> vector<16x64xf32>
    %169 = arith.mulf %168, %2 : vector<16x64xf32>
    %170 = vector.extract_strided_slice %169 {offsets = [0, 0], sizes = [8, 64], strides = [1, 1]} : vector<16x64xf32> to vector<8x64xf32>
    %cst_67 = arith.constant dense<0.000000e+00> : vector<64xf32>
    %171 = vector.multi_reduction <add>, %170, %cst_67 [0] : vector<8x64xf32> to vector<64xf32>
    %172 = vector.shape_cast %171 : vector<64xf32> to vector<1x64xf32>
    %173 = vector.extract_strided_slice %169 {offsets = [8, 0], sizes = [8, 64], strides = [1, 1]} : vector<16x64xf32> to vector<8x64xf32>
    %cst_68 = arith.constant dense<0.000000e+00> : vector<64xf32>
    %174 = vector.multi_reduction <add>, %173, %cst_68 [0] : vector<8x64xf32> to vector<64xf32>
    %175 = vector.shape_cast %174 : vector<64xf32> to vector<1x64xf32>
    %cst_69 = arith.constant 0.000000e+00 : f32
    %176 = vector.broadcast %cst_69 : f32 to vector<6x64xf32>
    %177 = tpu.concatenate %172, %175, %176 in 0 : vector<1x64xf32>, vector<1x64xf32>, vector<6x64xf32> -> vector<8x64xf32>
    %c687 = arith.constant 687 : index
    %c0_70 = arith.constant 0 : index
    %178 = vector.load %arg1[%c687, %c0_70] : memref<696x128xf32, #tpu.memory_space<vmem>>, vector<1x64xf32>
    %c688 = arith.constant 688 : index
    %c0_71 = arith.constant 0 : index
    %179 = vector.load %arg1[%c688, %c0_71] : memref<696x128xf32, #tpu.memory_space<vmem>>, vector<1x64xf32>
    %cst_72 = arith.constant dense<0.000000e+00> : vector<8xf32>
    %180 = vector.multi_reduction <add>, %177, %cst_72 [1] : vector<8x64xf32> to vector<8xf32>
    %181 = vector.shape_cast %180 : vector<8xf32> to vector<8x1xf32>
    %cst_73 = arith.constant 6.400000e+01 : f32
    %182 = vector.broadcast %cst_73 : f32 to vector<8x1xf32>
    %183 = arith.divf %181, %182 : vector<8x1xf32>
    %184 = vector.broadcast %183 : vector<8x1xf32> to vector<8x64xf32>
    %185 = arith.subf %177, %184 : vector<8x64xf32>
    %186 = arith.mulf %185, %185 : vector<8x64xf32>
    %cst_74 = arith.constant dense<0.000000e+00> : vector<8xf32>
    %187 = vector.multi_reduction <add>, %186, %cst_74 [1] : vector<8x64xf32> to vector<8xf32>
    %188 = vector.shape_cast %187 : vector<8xf32> to vector<8x1xf32>
    %cst_75 = arith.constant 6.400000e+01 : f32
    %189 = vector.broadcast %cst_75 : f32 to vector<8x1xf32>
    %190 = arith.divf %188, %189 : vector<8x1xf32>
    %191 = vector.broadcast %183 : vector<8x1xf32> to vector<8x64xf32>
    %192 = arith.subf %177, %191 : vector<8x64xf32>
    %cst_76 = arith.constant 9.99999974E-6 : f32
    %193 = vector.broadcast %cst_76 : f32 to vector<8x1xf32>
    %194 = arith.addf %190, %193 : vector<8x1xf32>
    %195 = math.rsqrt %194 : vector<8x1xf32>
    %196 = vector.broadcast %195 : vector<8x1xf32> to vector<8x64xf32>
    %197 = arith.mulf %192, %196 : vector<8x64xf32>
    %198 = vector.broadcast %178 : vector<1x64xf32> to vector<8x64xf32>
    %199 = arith.mulf %197, %198 : vector<8x64xf32>
    %200 = vector.broadcast %179 : vector<1x64xf32> to vector<8x64xf32>
    %201 = arith.addf %199, %200 : vector<8x64xf32>
    %c608 = arith.constant 608 : index
    %c0_77 = arith.constant 0 : index
    %202 = vector.load %arg1[%c608, %c0_77] : memref<696x128xf32, #tpu.memory_space<vmem>>, vector<64x128xf32>
    %cst_78 = arith.constant dense<0.000000e+00> : vector<8x128xf32>
    %203 = tpu.matmul %201, %202, %cst_78 {dimension_numbers = #tpu.dot_dimension_numbers<[1], [0], [0], [1], [0, 0, 1, 1], [], []>} : vector<8x64xf32>, vector<64x128xf32>, vector<8x128xf32> -> vector<8x128xf32>
    %c689 = arith.constant 689 : index
    %c0_79 = arith.constant 0 : index
    %204 = vector.load %arg1[%c689, %c0_79] : memref<696x128xf32, #tpu.memory_space<vmem>>, vector<1x128xf32>
    %205 = vector.broadcast %204 : vector<1x128xf32> to vector<8x128xf32>
    %206 = arith.addf %203, %205 : vector<8x128xf32>
    %c0_80 = arith.constant 0 : index
    %c0_81 = arith.constant 0 : index
    %207 = vector.load %arg2[%c0_80, %c0_81] : memref<8x128xf32, #tpu.memory_space<vmem>>, vector<8x128xf32>
    tpu.vector_store %arg2[%c0_80, %c0_81], %206 {strides = array<i32>} : memref<8x128xf32, #tpu.memory_space<vmem>>, vector<8x128xf32>,
    return
  }
}

</mosaic_0001>

<llo_original>
// kernel: relationship_encoder_forward.1
$region0: #{relationship_encoder_forward.1}
  #allocation0 [shape = 'u32[]', space=smem, size = 0x4, offset = 0x4, fixed_abs, tag = 'smem constant byte address 0x4 - core index']
  #allocation1 [shape = 'u32[144,128]{1,0:T(1,128)}', space=vmem, size = 0x12000, scoped, tag = 'internal scratch']
  %s0 = inlined_call_operand.vmem [shape: f32[32,256], index: 0, kind: input, shape index: {}]
  %s1 = inlined_call_operand.hbm [shape: f32[696,128], index: 1, kind: input, shape index: {}]
  %s2 = inlined_call_operand.vmem [shape: f32[8,128], index: 2, kind: output, shape index: {}]
  %s3 = sld [smem:[#allocation0]]
  $region22: #{relationship_encoder_forward.1} parent=0
    _
  %s5 = ssub.s32 1, %s3
  %s6 = scalar_select 0, %s5, %s3
  $region1: #{relationship_encoder_forward.1} parent=0
    #allocation2 [shape = 'u8[356352]{0}', space=vmem, size = 0x57000, scoped, tag = 'input window, operand 1, single buffered']
    #allocation3 [shape = 's32[1]{0}', space=sflag, size = 0x4, scoped, tag = 'scoped memory for relationship_encoder_forward.1']
    %7 = vsyncpa [#allocation3], 0
    // Predicated region
    $region2: #{relationship_encoder_forward.1} parent=1 // pred_check
      _
    $region3: #{relationship_encoder_forward.1} parent=1 // pred_check_branch
      %9 = sbr.rel (0) target = $region5
    $region4: #{relationship_encoder_forward.1} parent=1 // pred_region
      _
    $region5: #{relationship_encoder_forward.1} parent=1 // pred_fallthru
      _
    // Predicated region
    $region6: #{relationship_encoder_forward.1} parent=1 // pred_check
      _
    $region7: #{relationship_encoder_forward.1} parent=1 // pred_check_branch
      %11 = sbr.rel (0) target = $region9
    $region8: #{relationship_encoder_forward.1} parent=1 // pred_region
      %s13 = ssub.s32 11136, 11136
      %14 = vsyncadd [#allocation3], %s13
      %s15 = sshll.u32 [#allocation2], 4
      %s16 = int_to_ptr.vmem [resolvable:$true] %s15
      %21 = dma.hbm_to_vmem [thread:$0]  %s1, 11136, %s16, [#allocation3], 128, 128, 8
    $region9: #{relationship_encoder_forward.1} parent=1 // pred_fallthru
      _
    // Predicated region
    $region10: #{relationship_encoder_forward.1} parent=1 // pred_check
      _
    $region11: #{relationship_encoder_forward.1} parent=1 // pred_check_branch
      %23 = sbr.rel (0) target = $region13
    $region12: #{relationship_encoder_forward.1} parent=1 // pred_region
      %24 = dma.done [#allocation3], 11136
    $region13: #{relationship_encoder_forward.1} parent=1 // pred_fallthru
      _
    %v25 = vld [vmem:[%s0] sm:$0xff]
    %v26 = vld [vmem:[%s0 + $0x10] sm:$0xff]
    %v27 = vld [vmem:[%s0 + $0x20] sm:$0xff]
    %v28 = vld [vmem:[%s0 + $0x30] sm:$0xff]
    %v29 = vld [vmem:[%s0 + $0x8] sm:$0xff]
    %v30 = vld [vmem:[%s0 + $0x18] sm:$0xff]
    %v31 = vld [vmem:[#allocation2 + $0x2a0] sm:$0x1]
    %v32 = vld [vmem:[#allocation2 + $0x2a1] sm:$0x1]
    %vm33 = vcmask 261120
    %v34 = vsel %vm33, %v25, 0.0
    %35 = vadd.xlane.f32.xlu0 %v34
    %v36 = vpop.xlane.xlu0 %35
    %v37 = vsel %vm33, %v26, 0.0
    %38 = vadd.xlane.f32.xlu0 %v37
    %v39 = vpop.xlane.xlu0 %38
    %v40 = vrcp.pop 32.0
    %v41 = vmul.f32 %v36, %v40
    %v42 = vmul.f32 %v39, %v40
    %v43 = vsub.f32 %v25, %v41
    %v44 = vsub.f32 %v26, %v42
    %v45 = vmul.f32 %v43, %v43
    %v46 = vmul.f32 %v44, %v44
    %v47 = vsel %vm33, %v45, 0.0
    %48 = vadd.xlane.f32.xlu0 %v47
    %v49 = vpop.xlane.xlu0 %48
    %v50 = vsel %vm33, %v46, 0.0
    %51 = vadd.xlane.f32.xlu0 %v50
    %v52 = vpop.xlane.xlu0 %51
    %v53 = vmul.f32 %v49, %v40
    %v54 = vmul.f32 %v52, %v40
    %v55 = vadd.f32 %v53, 1e-12
    %v56 = vadd.f32 %v54, 1e-12
    %v57 = vrsqrt.pop %v55
    %v58 = vrsqrt.pop %v56
    %v59 = vmul.f32 %v43, %v57
    %v60 = vmul.f32 %v44, %v58
    %v61 = vlaneseq
    %v62 = vshrl.u32 %v61, 7
    %v63 = vsub.s32 0, %v62
    %v64 = vrot.slane %v31, %v63
    %v65 = vmul.f32 %v59, %v64
    %v66 = vmul.f32 %v60, %v64
    %v67 = vlaneseq
    %v68 = vshrl.u32 %v67, 7
    %v69 = vsub.s32 0, %v68
    %v70 = vrot.slane %v32, %v69
    %v71 = vadd.f32 %v65, %v70
    %v72 = vadd.f32 %v66, %v70
    %v73 = vld [vmem:[#allocation2] sm:$0xff]
    %v74 = vld [vmem:[#allocation2 + $0x8] sm:$0xff]
    %v75 = vld [vmem:[#allocation2 + $0x10] sm:$0xff]
    %v76 = vld [vmem:[#allocation2 + $0x18] sm:$0xff]
    %v77 = vld [vmem:[#allocation2 + $0x40] sm:$0xff]
    %v78 = vld [vmem:[#allocation2 + $0x48] sm:$0xff]
    %v79 = vld [vmem:[#allocation2 + $0x50] sm:$0xff]
    %v80 = vld [vmem:[#allocation2 + $0x58] sm:$0xff]
    %v81 = vld [vmem:[#allocation2 + $0x80] sm:$0xff]
    %v82 = vld [vmem:[#allocation2 + $0x88] sm:$0xff]
    %v83 = vld [vmem:[#allocation2 + $0x90] sm:$0xff]
    %v84 = vld [vmem:[#allocation2 + $0x98] sm:$0xff]
    %v85 = vld [vmem:[#allocation2 + $0xc0] sm:$0xff]
    %v86 = vld [vmem:[#allocation2 + $0xc8] sm:$0xff]
    %v87 = vld [vmem:[#allocation2 + $0xd0] sm:$0xff]
    %v88 = vld [vmem:[#allocation2 + $0xd8] sm:$0xff]
    %v89 = vld [vmem:[#allocation2 + $0xe0] sm:$0xff]
    %v90 = vld [vmem:[#allocation2 + $0xe8] sm:$0xff]
    %v91 = vld [vmem:[#allocation2 + $0xf0] sm:$0xff]
    %v92 = vld [vmem:[#allocation2 + $0xf8] sm:$0xff]
    %v93 = vld [vmem:[#allocation2 + $0x100] sm:$0xff]
    %v94 = vld [vmem:[#allocation2 + $0x108] sm:$0xff]
    %v95 = vld [vmem:[#allocation2 + $0x110] sm:$0xff]
    %v96 = vld [vmem:[#allocation2 + $0x118] sm:$0xff]
    %v97 = vld [vmem:[#allocation2 + $0x120] sm:$0xff]
    %v98 = vld [vmem:[#allocation2 + $0x128] sm:$0xff]
    %v99 = vld [vmem:[#allocation2 + $0x130] sm:$0xff]
    %v100 = vld [vmem:[#allocation2 + $0x138] sm:$0xff]
    %v101 = vld [vmem:[#allocation2 + $0x2a2] sm:$0x1]
    %v102 = vlaneseq
    %v103 = vshrl.u32 %v102, 7
    %v104 = vsub.s32 0, %v103
    %v105 = vrot.slane %v101, %v104
    %v107 = vsel %vm33, %v71, 0
    %v110 = vsel %vm33, %v72, 0
    %112 = vmatprep.subr.mxu0 0.0
    %113 = vmatpush1.msra.mxu0 0.0
    %114 = vmatprep.subr.mxu0 0.0
    %115 = vmatpush1.msra.mxu0 0.0
    %116 = vmatprep.subr.mxu0 0.0
    %117 = vmatpush1.msra.mxu0 0.0
    %118 = vmatprep.subr.mxu0 0.0
    %119 = vmatpush1.msra.mxu0 0.0
    %120 = vmatprep.subr.mxu0 0.0
    %121 = vmatpush1.msra.mxu0 0.0
    %122 = vmatprep.subr.mxu0 0.0
    %123 = vmatpush1.msra.mxu0 0.0
    %124 = vmatprep.subr.mxu0 0.0
    %125 = vmatpush1.msra.mxu0 0.0
    %126 = vmatprep.subr.mxu0 0.0
    %127 = vmatpush1.msra.mxu0 0.0
    %128 = vmatprep.subr.mxu0 0.0
    %129 = vmatpush1.msra.mxu0 0.0
    %130 = vmatprep.subr.mxu0 0.0
    %131 = vmatpush1.msra.mxu0 0.0
    %132 = vmatprep.subr.mxu0 0.0
    %133 = vmatpush1.msra.mxu0 0.0
    %134 = vmatprep.subr.mxu0 0.0
    %135 = vmatpush1.msra.mxu0 0.0
    %136 = vmatprep.subr.mxu0 0.0
    %137 = vmatpush1.msra.mxu0 %v76
    %138 = vmatprep.subr.mxu0 0.0
    %139 = vmatpush1.msra.mxu0 %v75
    %140 = vmatprep.subr.mxu0 0.0
    %141 = vmatpush1.msra.mxu0 %v74
    %142 = vmatprep.subr.mxu0 0.0
    %143 = vmatpush1.msra.mxu0 %v73
    %144 = vmatprep.subr.mxu0 0.0
    %145 = vmatpush2.msra.mxu0 0.0
    %146 = vmatprep.subr.mxu0 0.0
    %147 = vmatpush2.msra.mxu0 0.0
    %148 = vmatprep.subr.mxu0 0.0
    %149 = vmatpush2.msra.mxu0 0.0
    %150 = vmatprep.subr.mxu0 0.0
    %151 = vmatpush2.msra.mxu0 0.0
    %152 = vmatprep.subr.mxu0 0.0
    %153 = vmatpush2.msra.mxu0 0.0
    %154 = vmatprep.subr.mxu0 0.0
    %155 = vmatpush2.msra.mxu0 0.0
    %156 = vmatprep.subr.mxu0 0.0
    %157 = vmatpush2.msra.mxu0 0.0
    %158 = vmatprep.subr.mxu0 0.0
    %159 = vmatpush2.msra.mxu0 0.0
    %160 = vmatprep.subr.mxu0 0.0
    %161 = vmatpush2.msra.mxu0 0.0
    %162 = vmatprep.subr.mxu0 0.0
    %163 = vmatpush2.msra.mxu0 0.0
    %164 = vmatprep.subr.mxu0 0.0
    %165 = vmatpush2.msra.mxu0 0.0
    %166 = vmatprep.subr.mxu0 0.0
    %167 = vmatpush2.msra.mxu0 0.0
    %168 = vmatprep.subr.mxu0 0.0
    %169 = vmatpush2.msra.mxu0 0.0
    %170 = vmatprep.subr.mxu0 0.0
    %171 = vmatpush2.msra.mxu0 0.0
    %172 = vmatprep.subr.mxu0 0.0
    %173 = vmatpush2.msra.mxu0 0.0
    %174 = vmatprep.subr.mxu0 0.0
    %175 = vmatpush2.msra.mxu0 0.0
    %176 = vmatprep.mubr.f32.mxu0 0.0
    %177 = vmatmul.mubr.f32.gmra.mxu0 %v107
    %v178 = vpop.f32.mrf.mxu0
    %v179 = vadd.f32 %v105, %v178
    %v180 = vpop.f32.mrf.mxu0
    %181 = vmatprep.mubr.f32.mxu0 0.0
    %182 = vmatmul.mubr.f32.gmra.mxu0 %v110
    %v183 = vpop.f32.mrf.mxu0
    %v184 = vadd.f32 %v105, %v183
    %v185 = vpop.f32.mrf.mxu0
    %186 = vdwg.mxu0
    %v187 = vld [vmem:[#allocation2 + $0x2a4] sm:$0x1]
    %v188 = vlaneseq
    %v189 = vshrl.u32 %v188, 7
    %v190 = vsub.s32 0, %v189
    %v191 = vrot.slane %v187, %v190
    %192 = vmatprep.subr.mxu0 0.0
    %193 = vmatpush1.msra.mxu0 0.0
    %194 = vmatprep.subr.mxu0 0.0
    %195 = vmatpush1.msra.mxu0 0.0
    %196 = vmatprep.subr.mxu0 0.0
    %197 = vmatpush1.msra.mxu0 0.0
    %198 = vmatprep.subr.mxu0 0.0
    %199 = vmatpush1.msra.mxu0 0.0
    %200 = vmatprep.subr.mxu0 0.0
    %201 = vmatpush1.msra.mxu0 0.0
    %202 = vmatprep.subr.mxu0 0.0
    %203 = vmatpush1.msra.mxu0 0.0
    %204 = vmatprep.subr.mxu0 0.0
    %205 = vmatpush1.msra.mxu0 0.0
    %206 = vmatprep.subr.mxu0 0.0
    %207 = vmatpush1.msra.mxu0 0.0
    %208 = vmatprep.subr.mxu0 0.0
    %209 = vmatpush1.msra.mxu0 0.0
    %210 = vmatprep.subr.mxu0 0.0
    %211 = vmatpush1.msra.mxu0 0.0
    %212 = vmatprep.subr.mxu0 0.0
    %213 = vmatpush1.msra.mxu0 0.0
    %214 = vmatprep.subr.mxu0 0.0
    %215 = vmatpush1.msra.mxu0 0.0
    %216 = vmatprep.subr.mxu0 0.0
    %217 = vmatpush1.msra.mxu0 %v80
    %218 = vmatprep.subr.mxu0 0.0
    %219 = vmatpush1.msra.mxu0 %v79
    %220 = vmatprep.subr.mxu0 0.0
    %221 = vmatpush1.msra.mxu0 %v78
    %222 = vmatprep.subr.mxu0 0.0
    %223 = vmatpush1.msra.mxu0 %v77
    %224 = vmatprep.subr.mxu0 0.0
    %225 = vmatpush2.msra.mxu0 0.0
    %226 = vmatprep.subr.mxu0 0.0
    %227 = vmatpush2.msra.mxu0 0.0
    %228 = vmatprep.subr.mxu0 0.0
    %229 = vmatpush2.msra.mxu0 0.0
    %230 = vmatprep.subr.mxu0 0.0
    %231 = vmatpush2.msra.mxu0 0.0
    %232 = vmatprep.subr.mxu0 0.0
    %233 = vmatpush2.msra.mxu0 0.0
    %234 = vmatprep.subr.mxu0 0.0
    %235 = vmatpush2.msra.mxu0 0.0
    %236 = vmatprep.subr.mxu0 0.0
    %237 = vmatpush2.msra.mxu0 0.0
    %238 = vmatprep.subr.mxu0 0.0
    %239 = vmatpush2.msra.mxu0 0.0
    %240 = vmatprep.subr.mxu0 0.0
    %241 = vmatpush2.msra.mxu0 0.0
    %242 = vmatprep.subr.mxu0 0.0
    %243 = vmatpush2.msra.mxu0 0.0
    %244 = vmatprep.subr.mxu0 0.0
    %245 = vmatpush2.msra.mxu0 0.0
    %246 = vmatprep.subr.mxu0 0.0
    %247 = vmatpush2.msra.mxu0 0.0
    %248 = vmatprep.subr.mxu0 0.0
    %249 = vmatpush2.msra.mxu0 0.0
    %250 = vmatprep.subr.mxu0 0.0
    %251 = vmatpush2.msra.mxu0 0.0
    %252 = vmatprep.subr.mxu0 0.0
    %253 = vmatpush2.msra.mxu0 0.0
    %254 = vmatprep.subr.mxu0 0.0
    %255 = vmatpush2.msra.mxu0 0.0
    %256 = vmatprep.mubr.f32.mxu0 0.0
    %257 = vmatmul.mubr.f32.gmra.mxu0 %v107
    %v258 = vpop.f32.mrf.mxu0
    %v259 = vadd.f32 %v191, %v258
    %v260 = vpop.f32.mrf.mxu0
    %261 = vmatprep.mubr.f32.mxu0 0.0
    %262 = vmatmul.mubr.f32.gmra.mxu0 %v110
    %v263 = vpop.f32.mrf.mxu0
    %v264 = vadd.f32 %v191, %v263
    %v265 = vpop.f32.mrf.mxu0
    %266 = vdwg.mxu0
    %v267 = vld [vmem:[#allocation2 + $0x2a6] sm:$0x1]
    %v268 = vlaneseq
    %v269 = vshrl.u32 %v268, 7
    %v270 = vsub.s32 0, %v269
    %v271 = vrot.slane %v267, %v270
    %272 = vmatprep.subr.mxu0 0.0
    %273 = vmatpush1.msra.mxu0 0.0
    %274 = vmatprep.subr.mxu0 0.0
    %275 = vmatpush1.msra.mxu0 0.0
    %276 = vmatprep.subr.mxu0 0.0
    %277 = vmatpush1.msra.mxu0 0.0
    %278 = vmatprep.subr.mxu0 0.0
    %279 = vmatpush1.msra.mxu0 0.0
    %280 = vmatprep.subr.mxu0 0.0
    %281 = vmatpush1.msra.mxu0 0.0
    %282 = vmatprep.subr.mxu0 0.0
    %283 = vmatpush1.msra.mxu0 0.0
    %284 = vmatprep.subr.mxu0 0.0
    %285 = vmatpush1.msra.mxu0 0.0
    %286 = vmatprep.subr.mxu0 0.0
    %287 = vmatpush1.msra.mxu0 0.0
    %288 = vmatprep.subr.mxu0 0.0
    %289 = vmatpush1.msra.mxu0 0.0
    %290 = vmatprep.subr.mxu0 0.0
    %291 = vmatpush1.msra.mxu0 0.0
    %292 = vmatprep.subr.mxu0 0.0
    %293 = vmatpush1.msra.mxu0 0.0
    %294 = vmatprep.subr.mxu0 0.0
    %295 = vmatpush1.msra.mxu0 0.0
    %296 = vmatprep.subr.mxu0 0.0
    %297 = vmatpush1.msra.mxu0 %v84
    %298 = vmatprep.subr.mxu0 0.0
    %299 = vmatpush1.msra.mxu0 %v83
    %300 = vmatprep.subr.mxu0 0.0
    %301 = vmatpush1.msra.mxu0 %v82
    %302 = vmatprep.subr.mxu0 0.0
    %303 = vmatpush1.msra.mxu0 %v81
    %304 = vmatprep.subr.mxu0 0.0
    %305 = vmatpush2.msra.mxu0 0.0
    %306 = vmatprep.subr.mxu0 0.0
    %307 = vmatpush2.msra.mxu0 0.0
    %308 = vmatprep.subr.mxu0 0.0
    %309 = vmatpush2.msra.mxu0 0.0
    %310 = vmatprep.subr.mxu0 0.0
    %311 = vmatpush2.msra.mxu0 0.0
    %312 = vmatprep.subr.mxu0 0.0
    %313 = vmatpush2.msra.mxu0 0.0
    %314 = vmatprep.subr.mxu0 0.0
    %315 = vmatpush2.msra.mxu0 0.0
    %316 = vmatprep.subr.mxu0 0.0
    %317 = vmatpush2.msra.mxu0 0.0
    %318 = vmatprep.subr.mxu0 0.0
    %319 = vmatpush2.msra.mxu0 0.0
    %320 = vmatprep.subr.mxu0 0.0
    %321 = vmatpush2.msra.mxu0 0.0
    %322 = vmatprep.subr.mxu0 0.0
    %323 = vmatpush2.msra.mxu0 0.0
    %324 = vmatprep.subr.mxu0 0.0
    %325 = vmatpush2.msra.mxu0 0.0
    %326 = vmatprep.subr.mxu0 0.0
    %327 = vmatpush2.msra.mxu0 0.0
    %328 = vmatprep.subr.mxu0 0.0
    %329 = vmatpush2.msra.mxu0 0.0
    %330 = vmatprep.subr.mxu0 0.0
    %331 = vmatpush2.msra.mxu0 0.0
    %332 = vmatprep.subr.mxu0 0.0
    %333 = vmatpush2.msra.mxu0 0.0
    %334 = vmatprep.subr.mxu0 0.0
    %335 = vmatpush2.msra.mxu0 0.0
    %336 = vmatprep.mubr.f32.mxu0 0.0
    %337 = vmatmul.mubr.f32.gmra.mxu0 %v107
    %v338 = vpop.f32.mrf.mxu0
    %v339 = vadd.f32 %v271, %v338
    %v340 = vpop.f32.mrf.mxu0
    %341 = vmatprep.mubr.f32.mxu0 0.0
    %342 = vmatmul.mubr.f32.gmra.mxu0 %v110
    %v343 = vpop.f32.mrf.mxu0
    %v344 = vadd.f32 %v271, %v343
    %v345 = vpop.f32.mrf.mxu0
    %346 = vdwg.mxu0
    %347 = vmatprep.subr.mxu0 0.0
    %348 = vmatpush1.xpose.msra.mxu0 0.0
    %349 = vmatprep.subr.mxu0 0.0
    %350 = vmatpush1.xpose.msra.mxu0 0.0
    %351 = vmatprep.subr.mxu0 0.0
    %352 = vmatpush1.xpose.msra.mxu0 0.0
    %353 = vmatprep.subr.mxu0 0.0
    %354 = vmatpush1.xpose.msra.mxu0 0.0
    %355 = vmatprep.subr.mxu0 0.0
    %356 = vmatpush1.xpose.msra.mxu0 0.0
    %357 = vmatprep.subr.mxu0 0.0
    %358 = vmatpush1.xpose.msra.mxu0 0.0
    %359 = vmatprep.subr.mxu0 0.0
    %360 = vmatpush1.xpose.msra.mxu0 0.0
    %361 = vmatprep.subr.mxu0 0.0
    %362 = vmatpush1.xpose.msra.mxu0 0.0
    %363 = vmatprep.subr.mxu0 0.0
    %364 = vmatpush1.xpose.msra.mxu0 0.0
    %365 = vmatprep.subr.mxu0 0.0
    %366 = vmatpush1.xpose.msra.mxu0 0.0
    %367 = vmatprep.subr.mxu0 0.0
    %368 = vmatpush1.xpose.msra.mxu0 0.0
    %369 = vmatprep.subr.mxu0 0.0
    %370 = vmatpush1.xpose.msra.mxu0 0.0
    %371 = vmatprep.subr.mxu0 0.0
    %372 = vmatpush1.xpose.msra.mxu0 0.0
    %373 = vmatprep.subr.mxu0 0.0
    %374 = vmatpush1.xpose.msra.mxu0 0.0
    %375 = vmatprep.subr.mxu0 0.0
    %376 = vmatpush1.xpose.msra.mxu0 %v264
    %377 = vmatprep.subr.mxu0 0.0
    %378 = vmatpush1.xpose.msra.mxu0 %v259
    %379 = vmatprep.subr.mxu0 0.0
    %380 = vmatpush2.xpose.msra.mxu0 0.0
    %381 = vmatprep.subr.mxu0 0.0
    %382 = vmatpush2.xpose.msra.mxu0 0.0
    %383 = vmatprep.subr.mxu0 0.0
    %384 = vmatpush2.xpose.msra.mxu0 0.0
    %385 = vmatprep.subr.mxu0 0.0
    %386 = vmatpush2.xpose.msra.mxu0 0.0
    %387 = vmatprep.subr.mxu0 0.0
    %388 = vmatpush2.xpose.msra.mxu0 0.0
    %389 = vmatprep.subr.mxu0 0.0
    %390 = vmatpush2.xpose.msra.mxu0 0.0
    %391 = vmatprep.subr.mxu0 0.0
    %392 = vmatpush2.xpose.msra.mxu0 0.0
    %393 = vmatprep.subr.mxu0 0.0
    %394 = vmatpush2.xpose.msra.mxu0 0.0
    %395 = vmatprep.subr.mxu0 0.0
    %396 = vmatpush2.xpose.msra.mxu0 0.0
    %397 = vmatprep.subr.mxu0 0.0
    %398 = vmatpush2.xpose.msra.mxu0 0.0
    %399 = vmatprep.subr.mxu0 0.0
    %400 = vmatpush2.xpose.msra.mxu0 0.0
    %401 = vmatprep.subr.mxu0 0.0
    %402 = vmatpush2.xpose.msra.mxu0 0.0
    %403 = vmatprep.subr.mxu0 0.0
    %404 = vmatpush2.xpose.msra.mxu0 0.0
    %405 = vmatprep.subr.mxu0 0.0
    %406 = vmatpush2.xpose.msra.mxu0 0.0
    %407 = vmatprep.subr.mxu0 0.0
    %408 = vmatpush2.xpose.msra.mxu0 0.0
    %409 = vmatprep.subr.mxu0 0.0
    %410 = vmatpush2.xpose.msra.mxu0 0.0
    %411 = vmatprep.mubr.f32.mxu0 0.0
    %412 = vmatmul.mubr.f32.gmra.mxu0 %v179
    %v413 = vpop.f32.mrf.mxu0
    %v414 = vadd.f32 %v27, %v413
    %v415 = vpop.f32.mrf.mxu0
    %416 = vmatprep.mubr.f32.mxu0 0.0
    %417 = vmatmul.mubr.f32.gmra.mxu0 %v184
    %v418 = vpop.f32.mrf.mxu0
    %v419 = vadd.f32 %v28, %v418
    %v420 = vpop.f32.mrf.mxu0
    %421 = vdwg.mxu0
    %vm422 = vcmask 130048
    %v423 = vsel %vm422, %v414, -inf
    %424 = vmax.xlane.f32.xlu0 %v423
    %v425 = vpop.xlane.xlu0 %424
    %v426 = vsel %vm422, %v419, -inf
    %427 = vmax.xlane.f32.xlu0 %v426
    %v428 = vpop.xlane.xlu0 %427
    %v429 = vsub.f32 %v414, %v425
    %v430 = vsub.f32 %v419, %v428
    %v431 = vmul.f32 %v429, 1.442695
    %v432 = vpow.pop %v431
    %v433 = vmul.f32 %v430, 1.442695
    %v434 = vpow.pop %v433
    %v435 = vsel %vm422, %v432, 0.0
    %436 = vadd.xlane.f32.xlu0 %v435
    %v437 = vpop.xlane.xlu0 %436
    %v438 = vsel %vm422, %v434, 0.0
    %439 = vadd.xlane.f32.xlu0 %v438
    %v440 = vpop.xlane.xlu0 %439
    %v441 = vrcp.pop %v437
    %v442 = vrcp.pop %v440
    %v443 = vmul.f32 %v432, %v441
    %v444 = vmul.f32 %v434, %v442
    %v446 = vsel %vm422, %v443, 0
    %v449 = vsel %vm422, %v444, 0
    %451 = vmatprep.subr.mxu0 0.0
    %452 = vmatpush1.msra.mxu0 0.0
    %453 = vmatprep.subr.mxu0 0.0
    %454 = vmatpush1.msra.mxu0 0.0
    %455 = vmatprep.subr.mxu0 0.0
    %456 = vmatpush1.msra.mxu0 0.0
    %457 = vmatprep.subr.mxu0 0.0
    %458 = vmatpush1.msra.mxu0 0.0
    %459 = vmatprep.subr.mxu0 0.0
    %460 = vmatpush1.msra.mxu0 0.0
    %461 = vmatprep.subr.mxu0 0.0
    %462 = vmatpush1.msra.mxu0 0.0
    %463 = vmatprep.subr.mxu0 0.0
    %464 = vmatpush1.msra.mxu0 0.0
    %465 = vmatprep.subr.mxu0 0.0
    %466 = vmatpush1.msra.mxu0 0.0
    %467 = vmatprep.subr.mxu0 0.0
    %468 = vmatpush1.msra.mxu0 0.0
    %469 = vmatprep.subr.mxu0 0.0
    %470 = vmatpush1.msra.mxu0 0.0
    %471 = vmatprep.subr.mxu0 0.0
    %472 = vmatpush1.msra.mxu0 0.0
    %473 = vmatprep.subr.mxu0 0.0
    %474 = vmatpush1.msra.mxu0 0.0
    %475 = vmatprep.subr.mxu0 0.0
    %476 = vmatpush1.msra.mxu0 0.0
    %477 = vmatprep.subr.mxu0 0.0
    %478 = vmatpush1.msra.mxu0 0.0
    %479 = vmatprep.subr.mxu0 0.0
    %480 = vmatpush1.msra.mxu0 %v344
    %481 = vmatprep.subr.mxu0 0.0
    %482 = vmatpush1.msra.mxu0 %v339
    %483 = vmatprep.subr.mxu0 0.0
    %484 = vmatpush2.msra.mxu0 0.0
    %485 = vmatprep.subr.mxu0 0.0
    %486 = vmatpush2.msra.mxu0 0.0
    %487 = vmatprep.subr.mxu0 0.0
    %488 = vmatpush2.msra.mxu0 0.0
    %489 = vmatprep.subr.mxu0 0.0
    %490 = vmatpush2.msra.mxu0 0.0
    %491 = vmatprep.subr.mxu0 0.0
    %492 = vmatpush2.msra.mxu0 0.0
    %493 = vmatprep.subr.mxu0 0.0
    %494 = vmatpush2.msra.mxu0 0.0
    %495 = vmatprep.subr.mxu0 0.0
    %496 = vmatpush2.msra.mxu0 0.0
    %497 = vmatprep.subr.mxu0 0.0
    %498 = vmatpush2.msra.mxu0 0.0
    %499 = vmatprep.subr.mxu0 0.0
    %500 = vmatpush2.msra.mxu0 0.0
    %501 = vmatprep.subr.mxu0 0.0
    %502 = vmatpush2.msra.mxu0 0.0
    %503 = vmatprep.subr.mxu0 0.0
    %504 = vmatpush2.msra.mxu0 0.0
    %505 = vmatprep.subr.mxu0 0.0
    %506 = vmatpush2.msra.mxu0 0.0
    %507 = vmatprep.subr.mxu0 0.0
    %508 = vmatpush2.msra.mxu0 0.0
    %509 = vmatprep.subr.mxu0 0.0
    %510 = vmatpush2.msra.mxu0 0.0
    %511 = vmatprep.subr.mxu0 0.0
    %512 = vmatpush2.msra.mxu0 0.0
    %513 = vmatprep.subr.mxu0 0.0
    %514 = vmatpush2.msra.mxu0 0.0
    %515 = vmatprep.mubr.f32.mxu0 0.0
    %516 = vmatmul.mubr.f32.gmra.mxu0 %v446
    %v517 = vpop.f32.mrf.mxu0
    %v518 = vadd.f32 0.0, %v517
    %v519 = vpop.f32.mrf.mxu0
    %520 = vmatprep.mubr.f32.mxu0 0.0
    %521 = vmatmul.mubr.f32.gmra.mxu0 %v449
    %v522 = vpop.f32.mrf.mxu0
    %v523 = vadd.f32 0.0, %v522
    %v524 = vpop.f32.mrf.mxu0
    %525 = vdwg.mxu0
    %v526 = vld [vmem:[#allocation2 + $0x20] sm:$0xff]
    %v527 = vld [vmem:[#allocation2 + $0x28] sm:$0xff]
    %v528 = vld [vmem:[#allocation2 + $0x30] sm:$0xff]
    %v529 = vld [vmem:[#allocation2 + $0x38] sm:$0xff]
    %v530 = vld [vmem:[#allocation2 + $0x60] sm:$0xff]
    %v531 = vld [vmem:[#allocation2 + $0x68] sm:$0xff]
    %v532 = vld [vmem:[#allocation2 + $0x70] sm:$0xff]
    %v533 = vld [vmem:[#allocation2 + $0x78] sm:$0xff]
    %v534 = vld [vmem:[#allocation2 + $0xa0] sm:$0xff]
    %v535 = vld [vmem:[#allocation2 + $0xa8] sm:$0xff]
    %v536 = vld [vmem:[#allocation2 + $0xb0] sm:$0xff]
    %v537 = vld [vmem:[#allocation2 + $0xb8] sm:$0xff]
    %v538 = vld [vmem:[#allocation2 + $0x140] sm:$0xff]
    %v539 = vld [vmem:[#allocation2 + $0x148] sm:$0xff]
    %v540 = vld [vmem:[#allocation2 + $0x150] sm:$0xff]
    %v541 = vld [vmem:[#allocation2 + $0x158] sm:$0xff]
    %v542 = vld [vmem:[#allocation2 + $0x160] sm:$0xff]
    %v543 = vld [vmem:[#allocation2 + $0x168] sm:$0xff]
    %v544 = vld [vmem:[#allocation2 + $0x170] sm:$0xff]
    %v545 = vld [vmem:[#allocation2 + $0x178] sm:$0xff]
    %v546 = vld [vmem:[#allocation2 + $0x180] sm:$0xff]
    %v547 = vld [vmem:[#allocation2 + $0x188] sm:$0xff]
    %v548 = vld [vmem:[#allocation2 + $0x190] sm:$0xff]
    %v549 = vld [vmem:[#allocation2 + $0x198] sm:$0xff]
    %v550 = vld [vmem:[#allocation2 + $0x1a0] sm:$0xff]
    %v551 = vld [vmem:[#allocation2 + $0x1a8] sm:$0xff]
    %v552 = vld [vmem:[#allocation2 + $0x1b0] sm:$0xff]
    %v553 = vld [vmem:[#allocation2 + $0x1b8] sm:$0xff]
    %v554 = vld [vmem:[#allocation2 + $0x2a3] sm:$0x1]
    %v555 = vlaneseq
    %v556 = vshrl.u32 %v555, 7
    %v557 = vsub.s32 0, %v556
    %v558 = vrot.slane %v554, %v557
    %559 = vmatprep.subr.mxu0 0.0
    %560 = vmatpush1.msra.mxu0 0.0
    %561 = vmatprep.subr.mxu0 0.0
    %562 = vmatpush1.msra.mxu0 0.0
    %563 = vmatprep.subr.mxu0 0.0
    %564 = vmatpush1.msra.mxu0 0.0
    %565 = vmatprep.subr.mxu0 0.0
    %566 = vmatpush1.msra.mxu0 0.0
    %567 = vmatprep.subr.mxu0 0.0
    %568 = vmatpush1.msra.mxu0 0.0
    %569 = vmatprep.subr.mxu0 0.0
    %570 = vmatpush1.msra.mxu0 0.0
    %571 = vmatprep.subr.mxu0 0.0
    %572 = vmatpush1.msra.mxu0 0.0
    %573 = vmatprep.subr.mxu0 0.0
    %574 = vmatpush1.msra.mxu0 0.0
    %575 = vmatprep.subr.mxu0 0.0
    %576 = vmatpush1.msra.mxu0 0.0
    %577 = vmatprep.subr.mxu0 0.0
    %578 = vmatpush1.msra.mxu0 0.0
    %579 = vmatprep.subr.mxu0 0.0
    %580 = vmatpush1.msra.mxu0 0.0
    %581 = vmatprep.subr.mxu0 0.0
    %582 = vmatpush1.msra.mxu0 0.0
    %583 = vmatprep.subr.mxu0 0.0
    %584 = vmatpush1.msra.mxu0 %v529
    %585 = vmatprep.subr.mxu0 0.0
    %586 = vmatpush1.msra.mxu0 %v528
    %587 = vmatprep.subr.mxu0 0.0
    %588 = vmatpush1.msra.mxu0 %v527
    %589 = vmatprep.subr.mxu0 0.0
    %590 = vmatpush1.msra.mxu0 %v526
    %591 = vmatprep.subr.mxu0 0.0
    %592 = vmatpush2.msra.mxu0 0.0
    %593 = vmatprep.subr.mxu0 0.0
    %594 = vmatpush2.msra.mxu0 0.0
    %595 = vmatprep.subr.mxu0 0.0
    %596 = vmatpush2.msra.mxu0 0.0
    %597 = vmatprep.subr.mxu0 0.0
    %598 = vmatpush2.msra.mxu0 0.0
    %599 = vmatprep.subr.mxu0 0.0
    %600 = vmatpush2.msra.mxu0 0.0
    %601 = vmatprep.subr.mxu0 0.0
    %602 = vmatpush2.msra.mxu0 0.0
    %603 = vmatprep.subr.mxu0 0.0
    %604 = vmatpush2.msra.mxu0 0.0
    %605 = vmatprep.subr.mxu0 0.0
    %606 = vmatpush2.msra.mxu0 0.0
    %607 = vmatprep.subr.mxu0 0.0
    %608 = vmatpush2.msra.mxu0 0.0
    %609 = vmatprep.subr.mxu0 0.0
    %610 = vmatpush2.msra.mxu0 0.0
    %611 = vmatprep.subr.mxu0 0.0
    %612 = vmatpush2.msra.mxu0 0.0
    %613 = vmatprep.subr.mxu0 0.0
    %614 = vmatpush2.msra.mxu0 0.0
    %615 = vmatprep.subr.mxu0 0.0
    %616 = vmatpush2.msra.mxu0 0.0
    %617 = vmatprep.subr.mxu0 0.0
    %618 = vmatpush2.msra.mxu0 0.0
    %619 = vmatprep.subr.mxu0 0.0
    %620 = vmatpush2.msra.mxu0 0.0
    %621 = vmatprep.subr.mxu0 0.0
    %622 = vmatpush2.msra.mxu0 0.0
    %623 = vmatprep.mubr.f32.mxu0 0.0
    %624 = vmatmul.mubr.f32.gmra.mxu0 %v107
    %v625 = vpop.f32.mrf.mxu0
    %v626 = vadd.f32 %v558, %v625
    %v627 = vpop.f32.mrf.mxu0
    %628 = vmatprep.mubr.f32.mxu0 0.0
    %629 = vmatmul.mubr.f32.gmra.mxu0 %v110
    %v630 = vpop.f32.mrf.mxu0
    %v631 = vadd.f32 %v558, %v630
    %v632 = vpop.f32.mrf.mxu0
    %633 = vdwg.mxu0
    %v634 = vld [vmem:[#allocation2 + $0x2a5] sm:$0x1]
    %v635 = vlaneseq
    %v636 = vshrl.u32 %v635, 7
    %v637 = vsub.s32 0, %v636
    %v638 = vrot.slane %v634, %v637
    %639 = vmatprep.subr.mxu0 0.0
    %640 = vmatpush1.msra.mxu0 0.0
    %641 = vmatprep.subr.mxu0 0.0
    %642 = vmatpush1.msra.mxu0 0.0
    %643 = vmatprep.subr.mxu0 0.0
    %644 = vmatpush1.msra.mxu0 0.0
    %645 = vmatprep.subr.mxu0 0.0
    %646 = vmatpush1.msra.mxu0 0.0
    %647 = vmatprep.subr.mxu0 0.0
    %648 = vmatpush1.msra.mxu0 0.0
    %649 = vmatprep.subr.mxu0 0.0
    %650 = vmatpush1.msra.mxu0 0.0
    %651 = vmatprep.subr.mxu0 0.0
    %652 = vmatpush1.msra.mxu0 0.0
    %653 = vmatprep.subr.mxu0 0.0
    %654 = vmatpush1.msra.mxu0 0.0
    %655 = vmatprep.subr.mxu0 0.0
    %656 = vmatpush1.msra.mxu0 0.0
    %657 = vmatprep.subr.mxu0 0.0
    %658 = vmatpush1.msra.mxu0 0.0
    %659 = vmatprep.subr.mxu0 0.0
    %660 = vmatpush1.msra.mxu0 0.0
    %661 = vmatprep.subr.mxu0 0.0
    %662 = vmatpush1.msra.mxu0 0.0
    %663 = vmatprep.subr.mxu0 0.0
    %664 = vmatpush1.msra.mxu0 %v533
    %665 = vmatprep.subr.mxu0 0.0
    %666 = vmatpush1.msra.mxu0 %v532
    %667 = vmatprep.subr.mxu0 0.0
    %668 = vmatpush1.msra.mxu0 %v531
    %669 = vmatprep.subr.mxu0 0.0
    %670 = vmatpush1.msra.mxu0 %v530
    %671 = vmatprep.subr.mxu0 0.0
    %672 = vmatpush2.msra.mxu0 0.0
    %673 = vmatprep.subr.mxu0 0.0
    %674 = vmatpush2.msra.mxu0 0.0
    %675 = vmatprep.subr.mxu0 0.0
    %676 = vmatpush2.msra.mxu0 0.0
    %677 = vmatprep.subr.mxu0 0.0
    %678 = vmatpush2.msra.mxu0 0.0
    %679 = vmatprep.subr.mxu0 0.0
    %680 = vmatpush2.msra.mxu0 0.0
    %681 = vmatprep.subr.mxu0 0.0
    %682 = vmatpush2.msra.mxu0 0.0
    %683 = vmatprep.subr.mxu0 0.0
    %684 = vmatpush2.msra.mxu0 0.0
    %685 = vmatprep.subr.mxu0 0.0
    %686 = vmatpush2.msra.mxu0 0.0
    %687 = vmatprep.subr.mxu0 0.0
    %688 = vmatpush2.msra.mxu0 0.0
    %689 = vmatprep.subr.mxu0 0.0
    %690 = vmatpush2.msra.mxu0 0.0
    %691 = vmatprep.subr.mxu0 0.0
    %692 = vmatpush2.msra.mxu0 0.0
    %693 = vmatprep.subr.mxu0 0.0
    %694 = vmatpush2.msra.mxu0 0.0
    %695 = vmatprep.subr.mxu0 0.0
    %696 = vmatpush2.msra.mxu0 0.0
    %697 = vmatprep.subr.mxu0 0.0
    %698 = vmatpush2.msra.mxu0 0.0
    %699 = vmatprep.subr.mxu0 0.0
    %700 = vmatpush2.msra.mxu0 0.0
    %701 = vmatprep.subr.mxu0 0.0
    %702 = vmatpush2.msra.mxu0 0.0
    %703 = vmatprep.mubr.f32.mxu0 0.0
    %704 = vmatmul.mubr.f32.gmra.mxu0 %v107
    %v705 = vpop.f32.mrf.mxu0
    %v706 = vadd.f32 %v638, %v705
    %v707 = vpop.f32.mrf.mxu0
    %708 = vmatprep.mubr.f32.mxu0 0.0
    %709 = vmatmul.mubr.f32.gmra.mxu0 %v110
    %v710 = vpop.f32.mrf.mxu0
    %v711 = vadd.f32 %v638, %v710
    %v712 = vpop.f32.mrf.mxu0
    %713 = vdwg.mxu0
    %v714 = vld [vmem:[#allocation2 + $0x2a7] sm:$0x1]
    %v715 = vlaneseq
    %v716 = vshrl.u32 %v715, 7
    %v717 = vsub.s32 0, %v716
    %v718 = vrot.slane %v714, %v717
    %719 = vmatprep.subr.mxu0 0.0
    %720 = vmatpush1.msra.mxu0 0.0
    %721 = vmatprep.subr.mxu0 0.0
    %722 = vmatpush1.msra.mxu0 0.0
    %723 = vmatprep.subr.mxu0 0.0
    %724 = vmatpush1.msra.mxu0 0.0
    %725 = vmatprep.subr.mxu0 0.0
    %726 = vmatpush1.msra.mxu0 0.0
    %727 = vmatprep.subr.mxu0 0.0
    %728 = vmatpush1.msra.mxu0 0.0
    %729 = vmatprep.subr.mxu0 0.0
    %730 = vmatpush1.msra.mxu0 0.0
    %731 = vmatprep.subr.mxu0 0.0
    %732 = vmatpush1.msra.mxu0 0.0
    %733 = vmatprep.subr.mxu0 0.0
    %734 = vmatpush1.msra.mxu0 0.0
    %735 = vmatprep.subr.mxu0 0.0
    %736 = vmatpush1.msra.mxu0 0.0
    %737 = vmatprep.subr.mxu0 0.0
    %738 = vmatpush1.msra.mxu0 0.0
    %739 = vmatprep.subr.mxu0 0.0
    %740 = vmatpush1.msra.mxu0 0.0
    %741 = vmatprep.subr.mxu0 0.0
    %742 = vmatpush1.msra.mxu0 0.0
    %743 = vmatprep.subr.mxu0 0.0
    %744 = vmatpush1.msra.mxu0 %v537
    %745 = vmatprep.subr.mxu0 0.0
    %746 = vmatpush1.msra.mxu0 %v536
    %747 = vmatprep.subr.mxu0 0.0
    %748 = vmatpush1.msra.mxu0 %v535
    %749 = vmatprep.subr.mxu0 0.0
    %750 = vmatpush1.msra.mxu0 %v534
    %751 = vmatprep.subr.mxu0 0.0
    %752 = vmatpush2.msra.mxu0 0.0
    %753 = vmatprep.subr.mxu0 0.0
    %754 = vmatpush2.msra.mxu0 0.0
    %755 = vmatprep.subr.mxu0 0.0
    %756 = vmatpush2.msra.mxu0 0.0
    %757 = vmatprep.subr.mxu0 0.0
    %758 = vmatpush2.msra.mxu0 0.0
    %759 = vmatprep.subr.mxu0 0.0
    %760 = vmatpush2.msra.mxu0 0.0
    %761 = vmatprep.subr.mxu0 0.0
    %762 = vmatpush2.msra.mxu0 0.0
    %763 = vmatprep.subr.mxu0 0.0
    %764 = vmatpush2.msra.mxu0 0.0
    %765 = vmatprep.subr.mxu0 0.0
    %766 = vmatpush2.msra.mxu0 0.0
    %767 = vmatprep.subr.mxu0 0.0
    %768 = vmatpush2.msra.mxu0 0.0
    %769 = vmatprep.subr.mxu0 0.0
    %770 = vmatpush2.msra.mxu0 0.0
    %771 = vmatprep.subr.mxu0 0.0
    %772 = vmatpush2.msra.mxu0 0.0
    %773 = vmatprep.subr.mxu0 0.0
    %774 = vmatpush2.msra.mxu0 0.0
    %775 = vmatprep.subr.mxu0 0.0
    %776 = vmatpush2.msra.mxu0 0.0
    %777 = vmatprep.subr.mxu0 0.0
    %778 = vmatpush2.msra.mxu0 0.0
    %779 = vmatprep.subr.mxu0 0.0
    %780 = vmatpush2.msra.mxu0 0.0
    %781 = vmatprep.subr.mxu0 0.0
    %782 = vmatpush2.msra.mxu0 0.0
    %783 = vmatprep.mubr.f32.mxu0 0.0
    %784 = vmatmul.mubr.f32.gmra.mxu0 %v107
    %v785 = vpop.f32.mrf.mxu0
    %v786 = vadd.f32 %v718, %v785
    %v787 = vpop.f32.mrf.mxu0
    %788 = vmatprep.mubr.f32.mxu0 0.0
    %789 = vmatmul.mubr.f32.gmra.mxu0 %v110
    %v790 = vpop.f32.mrf.mxu0
    %v791 = vadd.f32 %v718, %v790
    %v792 = vpop.f32.mrf.mxu0
    %793 = vdwg.mxu0
    %794 = vmatprep.subr.mxu0 0.0
    %795 = vmatpush1.xpose.msra.mxu0 0.0
    %796 = vmatprep.subr.mxu0 0.0
    %797 = vmatpush1.xpose.msra.mxu0 0.0
    %798 = vmatprep.subr.mxu0 0.0
    %799 = vmatpush1.xpose.msra.mxu0 0.0
    %800 = vmatprep.subr.mxu0 0.0
    %801 = vmatpush1.xpose.msra.mxu0 0.0
    %802 = vmatprep.subr.mxu0 0.0
    %803 = vmatpush1.xpose.msra.mxu0 0.0
    %804 = vmatprep.subr.mxu0 0.0
    %805 = vmatpush1.xpose.msra.mxu0 0.0
    %806 = vmatprep.subr.mxu0 0.0
    %807 = vmatpush1.xpose.msra.mxu0 0.0
    %808 = vmatprep.subr.mxu0 0.0
    %809 = vmatpush1.xpose.msra.mxu0 0.0
    %810 = vmatprep.subr.mxu0 0.0
    %811 = vmatpush1.xpose.msra.mxu0 0.0
    %812 = vmatprep.subr.mxu0 0.0
    %813 = vmatpush1.xpose.msra.mxu0 0.0
    %814 = vmatprep.subr.mxu0 0.0
    %815 = vmatpush1.xpose.msra.mxu0 0.0
    %816 = vmatprep.subr.mxu0 0.0
    %817 = vmatpush1.xpose.msra.mxu0 0.0
    %818 = vmatprep.subr.mxu0 0.0
    %819 = vmatpush1.xpose.msra.mxu0 0.0
    %820 = vmatprep.subr.mxu0 0.0
    %821 = vmatpush1.xpose.msra.mxu0 0.0
    %822 = vmatprep.subr.mxu0 0.0
    %823 = vmatpush1.xpose.msra.mxu0 %v711
    %824 = vmatprep.subr.mxu0 0.0
    %825 = vmatpush1.xpose.msra.mxu0 %v706
    %826 = vmatprep.subr.mxu0 0.0
    %827 = vmatpush2.xpose.msra.mxu0 0.0
    %828 = vmatprep.subr.mxu0 0.0
    %829 = vmatpush2.xpose.msra.mxu0 0.0
    %830 = vmatprep.subr.mxu0 0.0
    %831 = vmatpush2.xpose.msra.mxu0 0.0
    %832 = vmatprep.subr.mxu0 0.0
    %833 = vmatpush2.xpose.msra.mxu0 0.0
    %834 = vmatprep.subr.mxu0 0.0
    %835 = vmatpush2.xpose.msra.mxu0 0.0
    %836 = vmatprep.subr.mxu0 0.0
    %837 = vmatpush2.xpose.msra.mxu0 0.0
    %838 = vmatprep.subr.mxu0 0.0
    %839 = vmatpush2.xpose.msra.mxu0 0.0
    %840 = vmatprep.subr.mxu0 0.0
    %841 = vmatpush2.xpose.msra.mxu0 0.0
    %842 = vmatprep.subr.mxu0 0.0
    %843 = vmatpush2.xpose.msra.mxu0 0.0
    %844 = vmatprep.subr.mxu0 0.0
    %845 = vmatpush2.xpose.msra.mxu0 0.0
    %846 = vmatprep.subr.mxu0 0.0
    %847 = vmatpush2.xpose.msra.mxu0 0.0
    %848 = vmatprep.subr.mxu0 0.0
    %849 = vmatpush2.xpose.msra.mxu0 0.0
    %850 = vmatprep.subr.mxu0 0.0
    %851 = vmatpush2.xpose.msra.mxu0 0.0
    %852 = vmatprep.subr.mxu0 0.0
    %853 = vmatpush2.xpose.msra.mxu0 0.0
    %854 = vmatprep.subr.mxu0 0.0
    %855 = vmatpush2.xpose.msra.mxu0 0.0
    %856 = vmatprep.subr.mxu0 0.0
    %857 = vmatpush2.xpose.msra.mxu0 0.0
    %858 = vmatprep.mubr.f32.mxu0 0.0
    %859 = vmatmul.mubr.f32.gmra.mxu0 %v626
    %v860 = vpop.f32.mrf.mxu0
    %v861 = vadd.f32 %v27, %v860
    %v862 = vpop.f32.mrf.mxu0
    %863 = vmatprep.mubr.f32.mxu0 0.0
    %864 = vmatmul.mubr.f32.gmra.mxu0 %v631
    %v865 = vpop.f32.mrf.mxu0
    %v866 = vadd.f32 %v28, %v865
    %v867 = vpop.f32.mrf.mxu0
    %868 = vdwg.mxu0
    %v869 = vsel %vm422, %v861, -inf
    %870 = vmax.xlane.f32.xlu0 %v869
    %v871 = vpop.xlane.xlu0 %870
    %v872 = vsel %vm422, %v866, -inf
    %873 = vmax.xlane.f32.xlu0 %v872
    %v874 = vpop.xlane.xlu0 %873
    %v875 = vsub.f32 %v861, %v871
    %v876 = vsub.f32 %v866, %v874
    %v877 = vmul.f32 %v875, 1.442695
    %v878 = vpow.pop %v877
    %v879 = vmul.f32 %v876, 1.442695
    %v880 = vpow.pop %v879
    %v881 = vsel %vm422, %v878, 0.0
    %882 = vadd.xlane.f32.xlu0 %v881
    %v883 = vpop.xlane.xlu0 %882
    %v884 = vsel %vm422, %v880, 0.0
    %885 = vadd.xlane.f32.xlu0 %v884
    %v886 = vpop.xlane.xlu0 %885
    %v887 = vrcp.pop %v883
    %v888 = vrcp.pop %v886
    %v889 = vmul.f32 %v878, %v887
    %v890 = vmul.f32 %v880, %v888
    %v892 = vsel %vm422, %v889, 0
    %v895 = vsel %vm422, %v890, 0
    %897 = vmatprep.subr.mxu0 0.0
    %898 = vmatpush1.msra.mxu0 0.0
    %899 = vmatprep.subr.mxu0 0.0
    %900 = vmatpush1.msra.mxu0 0.0
    %901 = vmatprep.subr.mxu0 0.0
    %902 = vmatpush1.msra.mxu0 0.0
    %903 = vmatprep.subr.mxu0 0.0
    %904 = vmatpush1.msra.mxu0 0.0
    %905 = vmatprep.subr.mxu0 0.0
    %906 = vmatpush1.msra.mxu0 0.0
    %907 = vmatprep.subr.mxu0 0.0
    %908 = vmatpush1.msra.mxu0 0.0
    %909 = vmatprep.subr.mxu0 0.0
    %910 = vmatpush1.msra.mxu0 0.0
    %911 = vmatprep.subr.mxu0 0.0
    %912 = vmatpush1.msra.mxu0 0.0
    %913 = vmatprep.subr.mxu0 0.0
    %914 = vmatpush1.msra.mxu0 0.0
    %915 = vmatprep.subr.mxu0 0.0
    %916 = vmatpush1.msra.mxu0 0.0
    %917 = vmatprep.subr.mxu0 0.0
    %918 = vmatpush1.msra.mxu0 0.0
    %919 = vmatprep.subr.mxu0 0.0
    %920 = vmatpush1.msra.mxu0 0.0
    %921 = vmatprep.subr.mxu0 0.0
    %922 = vmatpush1.msra.mxu0 0.0
    %923 = vmatprep.subr.mxu0 0.0
    %924 = vmatpush1.msra.mxu0 0.0
    %925 = vmatprep.subr.mxu0 0.0
    %926 = vmatpush1.msra.mxu0 %v791
    %927 = vmatprep.subr.mxu0 0.0
    %928 = vmatpush1.msra.mxu0 %v786
    %929 = vmatprep.subr.mxu0 0.0
    %930 = vmatpush2.msra.mxu0 0.0
    %931 = vmatprep.subr.mxu0 0.0
    %932 = vmatpush2.msra.mxu0 0.0
    %933 = vmatprep.subr.mxu0 0.0
    %934 = vmatpush2.msra.mxu0 0.0
    %935 = vmatprep.subr.mxu0 0.0
    %936 = vmatpush2.msra.mxu0 0.0
    %937 = vmatprep.subr.mxu0 0.0
    %938 = vmatpush2.msra.mxu0 0.0
    %939 = vmatprep.subr.mxu0 0.0
    %940 = vmatpush2.msra.mxu0 0.0
    %941 = vmatprep.subr.mxu0 0.0
    %942 = vmatpush2.msra.mxu0 0.0
    %943 = vmatprep.subr.mxu0 0.0
    %944 = vmatpush2.msra.mxu0 0.0
    %945 = vmatprep.subr.mxu0 0.0
    %946 = vmatpush2.msra.mxu0 0.0
    %947 = vmatprep.subr.mxu0 0.0
    %948 = vmatpush2.msra.mxu0 0.0
    %949 = vmatprep.subr.mxu0 0.0
    %950 = vmatpush2.msra.mxu0 0.0
    %951 = vmatprep.subr.mxu0 0.0
    %952 = vmatpush2.msra.mxu0 0.0
    %953 = vmatprep.subr.mxu0 0.0
    %954 = vmatpush2.msra.mxu0 0.0
    %955 = vmatprep.subr.mxu0 0.0
    %956 = vmatpush2.msra.mxu0 0.0
    %957 = vmatprep.subr.mxu0 0.0
    %958 = vmatpush2.msra.mxu0 0.0
    %959 = vmatprep.subr.mxu0 0.0
    %960 = vmatpush2.msra.mxu0 0.0
    %961 = vmatprep.mubr.f32.mxu0 0.0
    %962 = vmatmul.mubr.f32.gmra.mxu0 %v892
    %v963 = vpop.f32.mrf.mxu0
    %v964 = vadd.f32 0.0, %v963
    %v965 = vpop.f32.mrf.mxu0
    %966 = vmatprep.mubr.f32.mxu0 0.0
    %967 = vmatmul.mubr.f32.gmra.mxu0 %v895
    %v968 = vpop.f32.mrf.mxu0
    %v969 = vadd.f32 0.0, %v968
    %v970 = vpop.f32.mrf.mxu0
    %971 = vdwg.mxu0
    %972 = vmatprep.subr.mxu0 0.0
    %973 = vmatpush1.msra.mxu0 %v553
    %974 = vmatprep.subr.mxu0 0.0
    %975 = vmatpush1.msra.mxu0 %v552
    %976 = vmatprep.subr.mxu0 0.0
    %977 = vmatpush1.msra.mxu0 %v551
    %978 = vmatprep.subr.mxu0 0.0
    %979 = vmatpush1.msra.mxu0 %v550
    %980 = vmatprep.subr.mxu0 0.0
    %981 = vmatpush1.msra.mxu0 %v549
    %982 = vmatprep.subr.mxu0 0.0
    %983 = vmatpush1.msra.mxu0 %v548
    %984 = vmatprep.subr.mxu0 0.0
    %985 = vmatpush1.msra.mxu0 %v547
    %986 = vmatprep.subr.mxu0 0.0
    %987 = vmatpush1.msra.mxu0 %v546
    %988 = vmatprep.subr.mxu0 0.0
    %989 = vmatpush1.msra.mxu0 %v545
    %990 = vmatprep.subr.mxu0 0.0
    %991 = vmatpush1.msra.mxu0 %v544
    %992 = vmatprep.subr.mxu0 0.0
    %993 = vmatpush1.msra.mxu0 %v543
    %994 = vmatprep.subr.mxu0 0.0
    %995 = vmatpush1.msra.mxu0 %v542
    %996 = vmatprep.subr.mxu0 0.0
    %997 = vmatpush1.msra.mxu0 %v541
    %998 = vmatprep.subr.mxu0 0.0
    %999 = vmatpush1.msra.mxu0 %v540
    %1000 = vmatprep.subr.mxu0 0.0
    %1001 = vmatpush1.msra.mxu0 %v539
    %1002 = vmatprep.subr.mxu0 0.0
    %1003 = vmatpush1.msra.mxu0 %v538
    %1004 = vmatprep.subr.mxu0 0.0
    %1005 = vmatpush2.msra.mxu0 0.0
    %1006 = vmatprep.subr.mxu0 0.0
    %1007 = vmatpush2.msra.mxu0 0.0
    %1008 = vmatprep.subr.mxu0 0.0
    %1009 = vmatpush2.msra.mxu0 0.0
    %1010 = vmatprep.subr.mxu0 0.0
    %1011 = vmatpush2.msra.mxu0 0.0
    %1012 = vmatprep.subr.mxu0 0.0
    %1013 = vmatpush2.msra.mxu0 0.0
    %1014 = vmatprep.subr.mxu0 0.0
    %1015 = vmatpush2.msra.mxu0 0.0
    %1016 = vmatprep.subr.mxu0 0.0
    %1017 = vmatpush2.msra.mxu0 0.0
    %1018 = vmatprep.subr.mxu0 0.0
    %1019 = vmatpush2.msra.mxu0 0.0
    %1020 = vmatprep.subr.mxu0 0.0
    %1021 = vmatpush2.msra.mxu0 0.0
    %1022 = vmatprep.subr.mxu0 0.0
    %1023 = vmatpush2.msra.mxu0 0.0
    %1024 = vmatprep.subr.mxu0 0.0
    %1025 = vmatpush2.msra.mxu0 0.0
    %1026 = vmatprep.subr.mxu0 0.0
    %1027 = vmatpush2.msra.mxu0 0.0
    %1028 = vmatprep.subr.mxu0 0.0
    %1029 = vmatpush2.msra.mxu0 0.0
    %1030 = vmatprep.subr.mxu0 0.0
    %1031 = vmatpush2.msra.mxu0 0.0
    %1032 = vmatprep.subr.mxu0 0.0
    %1033 = vmatpush2.msra.mxu0 0.0
    %1034 = vmatprep.subr.mxu0 0.0
    %1035 = vmatpush2.msra.mxu0 0.0
    %1036 = vmatprep.mubr.f32.mxu0 0.0
    %1037 = vmatmul.mubr.f32.gmra.mxu0 %v964
    %v1038 = vpop.f32.mrf.mxu0
    %v1039 = vadd.f32 0.0, %v1038
    %v1040 = vpop.f32.mrf.mxu0
    %1041 = vmatprep.mubr.f32.mxu0 0.0
    %1042 = vmatmul.mubr.f32.gmra.mxu0 %v969
    %v1043 = vpop.f32.mrf.mxu0
    %v1044 = vadd.f32 0.0, %v1043
    %v1045 = vpop.f32.mrf.mxu0
    %1046 = vdwg.mxu0
    %1047 = vmatprep.subr.mxu0 0.0
    %1048 = vmatpush1.msra.mxu0 %v100
    %1049 = vmatprep.subr.mxu0 0.0
    %1050 = vmatpush1.msra.mxu0 %v99
    %1051 = vmatprep.subr.mxu0 0.0
    %1052 = vmatpush1.msra.mxu0 %v98
    %1053 = vmatprep.subr.mxu0 0.0
    %1054 = vmatpush1.msra.mxu0 %v97
    %1055 = vmatprep.subr.mxu0 0.0
    %1056 = vmatpush1.msra.mxu0 %v96
    %1057 = vmatprep.subr.mxu0 0.0
    %1058 = vmatpush1.msra.mxu0 %v95
    %1059 = vmatprep.subr.mxu0 0.0
    %1060 = vmatpush1.msra.mxu0 %v94
    %1061 = vmatprep.subr.mxu0 0.0
    %1062 = vmatpush1.msra.mxu0 %v93
    %1063 = vmatprep.subr.mxu0 0.0
    %1064 = vmatpush1.msra.mxu0 %v92
    %1065 = vmatprep.subr.mxu0 0.0
    %1066 = vmatpush1.msra.mxu0 %v91
    %1067 = vmatprep.subr.mxu0 0.0
    %1068 = vmatpush1.msra.mxu0 %v90
    %1069 = vmatprep.subr.mxu0 0.0
    %1070 = vmatpush1.msra.mxu0 %v89
    %1071 = vmatprep.subr.mxu0 0.0
    %1072 = vmatpush1.msra.mxu0 %v88
    %1073 = vmatprep.subr.mxu0 0.0
    %1074 = vmatpush1.msra.mxu0 %v87
    %1075 = vmatprep.subr.mxu0 0.0
    %1076 = vmatpush1.msra.mxu0 %v86
    %1077 = vmatprep.subr.mxu0 0.0
    %1078 = vmatpush1.msra.mxu0 %v85
    %1079 = vmatprep.subr.mxu0 0.0
    %1080 = vmatpush2.msra.mxu0 0.0
    %1081 = vmatprep.subr.mxu0 0.0
    %1082 = vmatpush2.msra.mxu0 0.0
    %1083 = vmatprep.subr.mxu0 0.0
    %1084 = vmatpush2.msra.mxu0 0.0
    %1085 = vmatprep.subr.mxu0 0.0
    %1086 = vmatpush2.msra.mxu0 0.0
    %1087 = vmatprep.subr.mxu0 0.0
    %1088 = vmatpush2.msra.mxu0 0.0
    %1089 = vmatprep.subr.mxu0 0.0
    %1090 = vmatpush2.msra.mxu0 0.0
    %1091 = vmatprep.subr.mxu0 0.0
    %1092 = vmatpush2.msra.mxu0 0.0
    %1093 = vmatprep.subr.mxu0 0.0
    %1094 = vmatpush2.msra.mxu0 0.0
    %1095 = vmatprep.subr.mxu0 0.0
    %1096 = vmatpush2.msra.mxu0 0.0
    %1097 = vmatprep.subr.mxu0 0.0
    %1098 = vmatpush2.msra.mxu0 0.0
    %1099 = vmatprep.subr.mxu0 0.0
    %1100 = vmatpush2.msra.mxu0 0.0
    %1101 = vmatprep.subr.mxu0 0.0
    %1102 = vmatpush2.msra.mxu0 0.0
    %1103 = vmatprep.subr.mxu0 0.0
    %1104 = vmatpush2.msra.mxu0 0.0
    %1105 = vmatprep.subr.mxu0 0.0
    %1106 = vmatpush2.msra.mxu0 0.0
    %1107 = vmatprep.subr.mxu0 0.0
    %1108 = vmatpush2.msra.mxu0 0.0
    %1109 = vmatprep.subr.mxu0 0.0
    %1110 = vmatpush2.msra.mxu0 0.0
    %1111 = vmatprep.mubr.f32.mxu0 0.0
    %1112 = vmatmul.mubr.f32.gmra.mxu0 %v518
    %v1113 = vpop.f32.mrf.mxu0
    %v1114 = vadd.f32 %v1039, %v1113
    %v1115 = vpop.f32.mrf.mxu0
    %1116 = vmatprep.mubr.f32.mxu0 0.0
    %1117 = vmatmul.mubr.f32.gmra.mxu0 %v523
    %v1118 = vpop.f32.mrf.mxu0
    %v1119 = vadd.f32 %v1044, %v1118
    %v1120 = vpop.f32.mrf.mxu0
    %1121 = vdwg.mxu0
    %v1122 = vld [vmem:[#allocation2 + $0x2a8] sm:$0x1]
    %v1123 = vlaneseq
    %v1124 = vshrl.u32 %v1123, 7
    %v1125 = vsub.s32 0, %v1124
    %v1126 = vrot.slane %v1122, %v1125
    %v1127 = vadd.f32 %v1114, %v1126
    %v1128 = vadd.f32 %v1119, %v1126
    %v1129 = vadd.f32 %v71, %v1127
    %v1130 = vadd.f32 %v72, %v1128
    %v1131 = vld [vmem:[#allocation2 + $0x2a9] sm:$0x1]
    %v1132 = vld [vmem:[#allocation2 + $0x2aa] sm:$0x1]
    %v1133 = vsel %vm33, %v1129, 0.0
    %1134 = vadd.xlane.f32.xlu0 %v1133
    %v1135 = vpop.xlane.xlu0 %1134
    %v1136 = vsel %vm33, %v1130, 0.0
    %1137 = vadd.xlane.f32.xlu0 %v1136
    %v1138 = vpop.xlane.xlu0 %1137
    %v1139 = vmul.f32 %v1135, %v40
    %v1140 = vmul.f32 %v1138, %v40
    %v1141 = vsub.f32 %v1129, %v1139
    %v1142 = vsub.f32 %v1130, %v1140
    %v1143 = vmul.f32 %v1141, %v1141
    %v1144 = vmul.f32 %v1142, %v1142
    %v1145 = vsel %vm33, %v1143, 0.0
    %1146 = vadd.xlane.f32.xlu0 %v1145
    %v1147 = vpop.xlane.xlu0 %1146
    %v1148 = vsel %vm33, %v1144, 0.0
    %1149 = vadd.xlane.f32.xlu0 %v1148
    %v1150 = vpop.xlane.xlu0 %1149
    %v1151 = vmul.f32 %v1147, %v40
    %v1152 = vmul.f32 %v1150, %v40
    %v1153 = vadd.f32 %v1151, 1e-12
    %v1154 = vadd.f32 %v1152, 1e-12
    %v1155 = vrsqrt.pop %v1153
    %v1156 = vrsqrt.pop %v1154
    %v1157 = vmul.f32 %v1141, %v1155
    %v1158 = vmul.f32 %v1142, %v1156
    %v1159 = vlaneseq
    %v1160 = vshrl.u32 %v1159, 7
    %v1161 = vsub.s32 0, %v1160
    %v1162 = vrot.slane %v1131, %v1161
    %v1163 = vmul.f32 %v1157, %v1162
    %v1164 = vmul.f32 %v1158, %v1162
    %v1165 = vlaneseq
    %v1166 = vshrl.u32 %v1165, 7
    %v1167 = vsub.s32 0, %v1166
    %v1168 = vrot.slane %v1132, %v1167
    %v1169 = vadd.f32 %v1163, %v1168
    %v1170 = vadd.f32 %v1164, %v1168
    %v1171 = vld [vmem:[#allocation2 + $0x1c0] sm:$0xff]
    %v1172 = vld [vmem:[#allocation2 + $0x1c8] sm:$0xff]
    %v1173 = vld [vmem:[#allocation2 + $0x1d0] sm:$0xff]
    %v1174 = vld [vmem:[#allocation2 + $0x1d8] sm:$0xff]
    %v1175 = vld [vmem:[#allocation2 + $0x2ab] sm:$0x1]
    %v1176 = vlaneseq
    %v1177 = vshrl.u32 %v1176, 7
    %v1178 = vsub.s32 0, %v1177
    %v1179 = vrot.slane %v1175, %v1178
    %v1181 = vsel %vm33, %v1169, 0
    %v1184 = vsel %vm33, %v1170, 0
    %1186 = vmatprep.subr.mxu0 0.0
    %1187 = vmatpush1.msra.mxu0 0.0
    %1188 = vmatprep.subr.mxu0 0.0
    %1189 = vmatpush1.msra.mxu0 0.0
    %1190 = vmatprep.subr.mxu0 0.0
    %1191 = vmatpush1.msra.mxu0 0.0
    %1192 = vmatprep.subr.mxu0 0.0
    %1193 = vmatpush1.msra.mxu0 0.0
    %1194 = vmatprep.subr.mxu0 0.0
    %1195 = vmatpush1.msra.mxu0 0.0
    %1196 = vmatprep.subr.mxu0 0.0
    %1197 = vmatpush1.msra.mxu0 0.0
    %1198 = vmatprep.subr.mxu0 0.0
    %1199 = vmatpush1.msra.mxu0 0.0
    %1200 = vmatprep.subr.mxu0 0.0
    %1201 = vmatpush1.msra.mxu0 0.0
    %1202 = vmatprep.subr.mxu0 0.0
    %1203 = vmatpush1.msra.mxu0 0.0
    %1204 = vmatprep.subr.mxu0 0.0
    %1205 = vmatpush1.msra.mxu0 0.0
    %1206 = vmatprep.subr.mxu0 0.0
    %1207 = vmatpush1.msra.mxu0 0.0
    %1208 = vmatprep.subr.mxu0 0.0
    %1209 = vmatpush1.msra.mxu0 0.0
    %1210 = vmatprep.subr.mxu0 0.0
    %1211 = vmatpush1.msra.mxu0 %v1174
    %1212 = vmatprep.subr.mxu0 0.0
    %1213 = vmatpush1.msra.mxu0 %v1173
    %1214 = vmatprep.subr.mxu0 0.0
    %1215 = vmatpush1.msra.mxu0 %v1172
    %1216 = vmatprep.subr.mxu0 0.0
    %1217 = vmatpush1.msra.mxu0 %v1171
    %1218 = vmatprep.subr.mxu0 0.0
    %1219 = vmatpush2.msra.mxu0 0.0
    %1220 = vmatprep.subr.mxu0 0.0
    %1221 = vmatpush2.msra.mxu0 0.0
    %1222 = vmatprep.subr.mxu0 0.0
    %1223 = vmatpush2.msra.mxu0 0.0
    %1224 = vmatprep.subr.mxu0 0.0
    %1225 = vmatpush2.msra.mxu0 0.0
    %1226 = vmatprep.subr.mxu0 0.0
    %1227 = vmatpush2.msra.mxu0 0.0
    %1228 = vmatprep.subr.mxu0 0.0
    %1229 = vmatpush2.msra.mxu0 0.0
    %1230 = vmatprep.subr.mxu0 0.0
    %1231 = vmatpush2.msra.mxu0 0.0
    %1232 = vmatprep.subr.mxu0 0.0
    %1233 = vmatpush2.msra.mxu0 0.0
    %1234 = vmatprep.subr.mxu0 0.0
    %1235 = vmatpush2.msra.mxu0 0.0
    %1236 = vmatprep.subr.mxu0 0.0
    %1237 = vmatpush2.msra.mxu0 0.0
    %1238 = vmatprep.subr.mxu0 0.0
    %1239 = vmatpush2.msra.mxu0 0.0
    %1240 = vmatprep.subr.mxu0 0.0
    %1241 = vmatpush2.msra.mxu0 0.0
    %1242 = vmatprep.subr.mxu0 0.0
    %1243 = vmatpush2.msra.mxu0 0.0
    %1244 = vmatprep.subr.mxu0 0.0
    %1245 = vmatpush2.msra.mxu0 0.0
    %1246 = vmatprep.subr.mxu0 0.0
    %1247 = vmatpush2.msra.mxu0 0.0
    %1248 = vmatprep.subr.mxu0 0.0
    %1249 = vmatpush2.msra.mxu0 0.0
    %1250 = vmatprep.mubr.f32.mxu0 0.0
    %1251 = vmatmul.mubr.f32.gmra.mxu0 %v1181
    %v1252 = vpop.f32.mrf.mxu0
    %v1253 = vadd.f32 %v1179, %v1252
    %v1254 = vpop.f32.mrf.mxu0
    %1255 = vmatprep.mubr.f32.mxu0 0.0
    %1256 = vmatmul.mubr.f32.gmra.mxu0 %v1184
    %v1257 = vpop.f32.mrf.mxu0
    %v1258 = vadd.f32 %v1179, %v1257
    %v1259 = vpop.f32.mrf.mxu0
    %1260 = vdwg.mxu0
    %v1261 = vmul.f32 %v1253, 0.5
    %v1262 = vmul.f32 %v1258, 0.5
    %v1263 = vmul.f32 %v1253, 0.044715
    %v1264 = vmul.f32 %v1258, 0.044715
    %v1265 = vmul.f32 %v1263, %v1253
    %v1266 = vmul.f32 %v1264, %v1258
    %v1267 = vmul.f32 %v1265, %v1253
    %v1268 = vmul.f32 %v1266, %v1258
    %v1269 = vadd.f32 %v1253, %v1267
    %v1270 = vadd.f32 %v1258, %v1268
    %v1271 = vmul.f32 %v1269, 0.7978846
    %v1272 = vmul.f32 %v1270, 0.7978846
    %v1273 = vtanh.pop %v1271
    %v1274 = vtanh.pop %v1272
    %v1275 = vadd.f32 %v1273, 1.0
    %v1276 = vadd.f32 %v1274, 1.0
    %v1277 = vmul.f32 %v1261, %v1275
    %v1278 = vmul.f32 %v1262, %v1276
    %v1279 = vld [vmem:[#allocation2 + $0x1e0] sm:$0xff]
    %v1280 = vld [vmem:[#allocation2 + $0x1e8] sm:$0xff]
    %v1281 = vld [vmem:[#allocation2 + $0x1f0] sm:$0xff]
    %v1282 = vld [vmem:[#allocation2 + $0x1f8] sm:$0xff]
    %v1283 = vld [vmem:[#allocation2 + $0x200] sm:$0xff]
    %v1284 = vld [vmem:[#allocation2 + $0x208] sm:$0xff]
    %v1285 = vld [vmem:[#allocation2 + $0x210] sm:$0xff]
    %v1286 = vld [vmem:[#allocation2 + $0x218] sm:$0xff]
    %v1287 = vld [vmem:[#allocation2 + $0x220] sm:$0xff]
    %v1288 = vld [vmem:[#allocation2 + $0x228] sm:$0xff]
    %v1289 = vld [vmem:[#allocation2 + $0x230] sm:$0xff]
    %v1290 = vld [vmem:[#allocation2 + $0x238] sm:$0xff]
    %v1291 = vld [vmem:[#allocation2 + $0x240] sm:$0xff]
    %v1292 = vld [vmem:[#allocation2 + $0x248] sm:$0xff]
    %v1293 = vld [vmem:[#allocation2 + $0x250] sm:$0xff]
    %v1294 = vld [vmem:[#allocation2 + $0x258] sm:$0xff]
    %1295 = vmatprep.subr.mxu0 0.0
    %1296 = vmatpush1.msra.mxu0 %v1294
    %1297 = vmatprep.subr.mxu0 0.0
    %1298 = vmatpush1.msra.mxu0 %v1293
    %1299 = vmatprep.subr.mxu0 0.0
    %1300 = vmatpush1.msra.mxu0 %v1292
    %1301 = vmatprep.subr.mxu0 0.0
    %1302 = vmatpush1.msra.mxu0 %v1291
    %1303 = vmatprep.subr.mxu0 0.0
    %1304 = vmatpush1.msra.mxu0 %v1290
    %1305 = vmatprep.subr.mxu0 0.0
    %1306 = vmatpush1.msra.mxu0 %v1289
    %1307 = vmatprep.subr.mxu0 0.0
    %1308 = vmatpush1.msra.mxu0 %v1288
    %1309 = vmatprep.subr.mxu0 0.0
    %1310 = vmatpush1.msra.mxu0 %v1287
    %1311 = vmatprep.subr.mxu0 0.0
    %1312 = vmatpush1.msra.mxu0 %v1286
    %1313 = vmatprep.subr.mxu0 0.0
    %1314 = vmatpush1.msra.mxu0 %v1285
    %1315 = vmatprep.subr.mxu0 0.0
    %1316 = vmatpush1.msra.mxu0 %v1284
    %1317 = vmatprep.subr.mxu0 0.0
    %1318 = vmatpush1.msra.mxu0 %v1283
    %1319 = vmatprep.subr.mxu0 0.0
    %1320 = vmatpush1.msra.mxu0 %v1282
    %1321 = vmatprep.subr.mxu0 0.0
    %1322 = vmatpush1.msra.mxu0 %v1281
    %1323 = vmatprep.subr.mxu0 0.0
    %1324 = vmatpush1.msra.mxu0 %v1280
    %1325 = vmatprep.subr.mxu0 0.0
    %1326 = vmatpush1.msra.mxu0 %v1279
    %1327 = vmatprep.subr.mxu0 0.0
    %1328 = vmatpush2.msra.mxu0 0.0
    %1329 = vmatprep.subr.mxu0 0.0
    %1330 = vmatpush2.msra.mxu0 0.0
    %1331 = vmatprep.subr.mxu0 0.0
    %1332 = vmatpush2.msra.mxu0 0.0
    %1333 = vmatprep.subr.mxu0 0.0
    %1334 = vmatpush2.msra.mxu0 0.0
    %1335 = vmatprep.subr.mxu0 0.0
    %1336 = vmatpush2.msra.mxu0 0.0
    %1337 = vmatprep.subr.mxu0 0.0
    %1338 = vmatpush2.msra.mxu0 0.0
    %1339 = vmatprep.subr.mxu0 0.0
    %1340 = vmatpush2.msra.mxu0 0.0
    %1341 = vmatprep.subr.mxu0 0.0
    %1342 = vmatpush2.msra.mxu0 0.0
    %1343 = vmatprep.subr.mxu0 0.0
    %1344 = vmatpush2.msra.mxu0 0.0
    %1345 = vmatprep.subr.mxu0 0.0
    %1346 = vmatpush2.msra.mxu0 0.0
    %1347 = vmatprep.subr.mxu0 0.0
    %1348 = vmatpush2.msra.mxu0 0.0
    %1349 = vmatprep.subr.mxu0 0.0
    %1350 = vmatpush2.msra.mxu0 0.0
    %1351 = vmatprep.subr.mxu0 0.0
    %1352 = vmatpush2.msra.mxu0 0.0
    %1353 = vmatprep.subr.mxu0 0.0
    %1354 = vmatpush2.msra.mxu0 0.0
    %1355 = vmatprep.subr.mxu0 0.0
    %1356 = vmatpush2.msra.mxu0 0.0
    %1357 = vmatprep.subr.mxu0 0.0
    %1358 = vmatpush2.msra.mxu0 0.0
    %1359 = vmatprep.mubr.f32.mxu0 0.0
    %1360 = vmatmul.mubr.f32.gmra.mxu0 %v1277
    %v1361 = vpop.f32.mrf.mxu0
    %v1362 = vadd.f32 0.0, %v1361
    %v1363 = vpop.f32.mrf.mxu0
    %1364 = vmatprep.mubr.f32.mxu0 0.0
    %1365 = vmatmul.mubr.f32.gmra.mxu0 %v1278
    %v1366 = vpop.f32.mrf.mxu0
    %v1367 = vadd.f32 0.0, %v1366
    %v1368 = vpop.f32.mrf.mxu0
    %1369 = vdwg.mxu0
    %v1370 = vld [vmem:[#allocation2 + $0x2ac] sm:$0x1]
    %v1371 = vlaneseq
    %v1372 = vshrl.u32 %v1371, 7
    %v1373 = vsub.s32 0, %v1372
    %v1374 = vrot.slane %v1370, %v1373
    %v1375 = vadd.f32 %v1362, %v1374
    %v1376 = vadd.f32 %v1367, %v1374
    %v1377 = vadd.f32 %v1169, %v1375
    %v1378 = vadd.f32 %v1170, %v1376
    %v1379 = vld [vmem:[#allocation2 + $0x2ad] sm:$0x1]
    %v1380 = vld [vmem:[#allocation2 + $0x2ae] sm:$0x1]
    %v1381 = vsel %vm33, %v1377, 0.0
    %1382 = vadd.xlane.f32.xlu0 %v1381
    %v1383 = vpop.xlane.xlu0 %1382
    %v1384 = vsel %vm33, %v1378, 0.0
    %1385 = vadd.xlane.f32.xlu0 %v1384
    %v1386 = vpop.xlane.xlu0 %1385
    %v1387 = vmul.f32 %v1383, %v40
    %v1388 = vmul.f32 %v1386, %v40
    %v1389 = vsub.f32 %v1377, %v1387
    %v1390 = vsub.f32 %v1378, %v1388
    %v1391 = vmul.f32 %v1389, %v1389
    %v1392 = vmul.f32 %v1390, %v1390
    %v1393 = vsel %vm33, %v1391, 0.0
    %1394 = vadd.xlane.f32.xlu0 %v1393
    %v1395 = vpop.xlane.xlu0 %1394
    %v1396 = vsel %vm33, %v1392, 0.0
    %1397 = vadd.xlane.f32.xlu0 %v1396
    %v1398 = vpop.xlane.xlu0 %1397
    %v1399 = vmul.f32 %v1395, %v40
    %v1400 = vmul.f32 %v1398, %v40
    %v1401 = vadd.f32 %v1399, 1e-12
    %v1402 = vadd.f32 %v1400, 1e-12
    %v1403 = vrsqrt.pop %v1401
    %v1404 = vrsqrt.pop %v1402
    %v1405 = vmul.f32 %v1389, %v1403
    %v1406 = vmul.f32 %v1390, %v1404
    %v1407 = vlaneseq
    %v1408 = vshrl.u32 %v1407, 7
    %v1409 = vsub.s32 0, %v1408
    %v1410 = vrot.slane %v1379, %v1409
    %v1411 = vmul.f32 %v1405, %v1410
    %v1412 = vmul.f32 %v1406, %v1410
    %v1413 = vlaneseq
    %v1414 = vshrl.u32 %v1413, 7
    %v1415 = vsub.s32 0, %v1414
    %v1416 = vrot.slane %v1380, %v1415
    %v1417 = vadd.f32 %v1411, %v1416
    %v1418 = vadd.f32 %v1412, %v1416
    %1421 = vrot.lane.b32.xlu0 %v1417, 32
    %v1422 = vpop.permute.xlu0 %1421
    %1423 = vrot.lane.b32.xlu0 %v1418, 32
    %v1424 = vpop.permute.xlu0 %1423
    %v1427 = vsel %vm33, %v1417, %v1422
    %v1428 = vsel %vm33, %v1418, %v1424
    %v1429 = vmul.f32 %v1427, %v29
    %v1430 = vmul.f32 %v1428, %v30
    %vm1431 = vcmask 523264
    %v1432 = vsel %vm1431, %v1429, 0.0
    %v1433 = vrot.slane %v1432, 4
    %v1434 = vadd.f32 %v1432, %v1433
    %v1435 = vrot.slane %v1434, 2
    %v1436 = vadd.f32 %v1434, %v1435
    %v1437 = vrot.slane %v1436, 1
    %v1438 = vadd.f32 %v1436, %v1437
    %v1439 = vsel %vm1431, %v1430, 0.0
    %v1440 = vrot.slane %v1439, 4
    %v1441 = vadd.f32 %v1439, %v1440
    %v1442 = vrot.slane %v1441, 2
    %v1443 = vadd.f32 %v1441, %v1442
    %v1444 = vrot.slane %v1443, 1
    %v1445 = vadd.f32 %v1443, %v1444
    %vm1446 = vcmask 1040384
    %v1447 = vsel %vm1446, %v1438, %v1445
    %vm1448 = vcmask 1041408
    %v1449 = vsel %vm1448, %v1447, 0.0
    %v1450 = vld [vmem:[#allocation2 + $0x2af] sm:$0x1]
    %v1451 = vld [vmem:[#allocation2 + $0x2b0] sm:$0x1]
    %v1452 = vsel %vm1431, %v1449, 0.0
    %1453 = vadd.xlane.f32.xlu0 %v1452
    %v1454 = vpop.xlane.xlu0 %1453
    %v1455 = vrcp.pop 64.0
    %v1456 = vmul.f32 %v1454, %v1455
    %v1457 = vsub.f32 %v1449, %v1456
    %v1458 = vmul.f32 %v1457, %v1457
    %v1459 = vsel %vm1431, %v1458, 0.0
    %1460 = vadd.xlane.f32.xlu0 %v1459
    %v1461 = vpop.xlane.xlu0 %1460
    %v1462 = vmul.f32 %v1461, %v1455
    %v1463 = vadd.f32 %v1462, 1e-05
    %v1464 = vrsqrt.pop %v1463
    %v1465 = vmul.f32 %v1457, %v1464
    %v1466 = vlaneseq
    %v1467 = vshrl.u32 %v1466, 7
    %v1468 = vsub.s32 0, %v1467
    %v1469 = vrot.slane %v1450, %v1468
    %v1470 = vmul.f32 %v1465, %v1469
    %v1471 = vlaneseq
    %v1472 = vshrl.u32 %v1471, 7
    %v1473 = vsub.s32 0, %v1472
    %v1474 = vrot.slane %v1451, %v1473
    %v1475 = vadd.f32 %v1470, %v1474
    %v1476 = vld [vmem:[#allocation2 + $0x260] sm:$0xff]
    %v1477 = vld [vmem:[#allocation2 + $0x268] sm:$0xff]
    %v1478 = vld [vmem:[#allocation2 + $0x270] sm:$0xff]
    %v1479 = vld [vmem:[#allocation2 + $0x278] sm:$0xff]
    %v1480 = vld [vmem:[#allocation2 + $0x280] sm:$0xff]
    %v1481 = vld [vmem:[#allocation2 + $0x288] sm:$0xff]
    %v1482 = vld [vmem:[#allocation2 + $0x290] sm:$0xff]
    %v1483 = vld [vmem:[#allocation2 + $0x298] sm:$0xff]
    %v1484 = vld [vmem:[#allocation2 + $0x2b1] sm:$0x1]
    %v1485 = vlaneseq
    %v1486 = vshrl.u32 %v1485, 7
    %v1487 = vsub.s32 0, %v1486
    %v1488 = vrot.slane %v1484, %v1487
    %v1490 = vsel %vm1431, %v1475, 0
    %1492 = vmatprep.subr.mxu0 0.0
    %1493 = vmatpush1.msra.mxu0 0.0
    %1494 = vmatprep.subr.mxu0 0.0
    %1495 = vmatpush1.msra.mxu0 0.0
    %1496 = vmatprep.subr.mxu0 0.0
    %1497 = vmatpush1.msra.mxu0 0.0
    %1498 = vmatprep.subr.mxu0 0.0
    %1499 = vmatpush1.msra.mxu0 0.0
    %1500 = vmatprep.subr.mxu0 0.0
    %1501 = vmatpush1.msra.mxu0 0.0
    %1502 = vmatprep.subr.mxu0 0.0
    %1503 = vmatpush1.msra.mxu0 0.0
    %1504 = vmatprep.subr.mxu0 0.0
    %1505 = vmatpush1.msra.mxu0 0.0
    %1506 = vmatprep.subr.mxu0 0.0
    %1507 = vmatpush1.msra.mxu0 0.0
    %1508 = vmatprep.subr.mxu0 0.0
    %1509 = vmatpush1.msra.mxu0 %v1483
    %1510 = vmatprep.subr.mxu0 0.0
    %1511 = vmatpush1.msra.mxu0 %v1482
    %1512 = vmatprep.subr.mxu0 0.0
    %1513 = vmatpush1.msra.mxu0 %v1481
    %1514 = vmatprep.subr.mxu0 0.0
    %1515 = vmatpush1.msra.mxu0 %v1480
    %1516 = vmatprep.subr.mxu0 0.0
    %1517 = vmatpush1.msra.mxu0 %v1479
    %1518 = vmatprep.subr.mxu0 0.0
    %1519 = vmatpush1.msra.mxu0 %v1478
    %1520 = vmatprep.subr.mxu0 0.0
    %1521 = vmatpush1.msra.mxu0 %v1477
    %1522 = vmatprep.subr.mxu0 0.0
    %1523 = vmatpush1.msra.mxu0 %v1476
    %1524 = vmatprep.subr.mxu0 0.0
    %1525 = vmatpush2.msra.mxu0 0.0
    %1526 = vmatprep.subr.mxu0 0.0
    %1527 = vmatpush2.msra.mxu0 0.0
    %1528 = vmatprep.subr.mxu0 0.0
    %1529 = vmatpush2.msra.mxu0 0.0
    %1530 = vmatprep.subr.mxu0 0.0
    %1531 = vmatpush2.msra.mxu0 0.0
    %1532 = vmatprep.subr.mxu0 0.0
    %1533 = vmatpush2.msra.mxu0 0.0
    %1534 = vmatprep.subr.mxu0 0.0
    %1535 = vmatpush2.msra.mxu0 0.0
    %1536 = vmatprep.subr.mxu0 0.0
    %1537 = vmatpush2.msra.mxu0 0.0
    %1538 = vmatprep.subr.mxu0 0.0
    %1539 = vmatpush2.msra.mxu0 0.0
    %1540 = vmatprep.subr.mxu0 0.0
    %1541 = vmatpush2.msra.mxu0 0.0
    %1542 = vmatprep.subr.mxu0 0.0
    %1543 = vmatpush2.msra.mxu0 0.0
    %1544 = vmatprep.subr.mxu0 0.0
    %1545 = vmatpush2.msra.mxu0 0.0
    %1546 = vmatprep.subr.mxu0 0.0
    %1547 = vmatpush2.msra.mxu0 0.0
    %1548 = vmatprep.subr.mxu0 0.0
    %1549 = vmatpush2.msra.mxu0 0.0
    %1550 = vmatprep.subr.mxu0 0.0
    %1551 = vmatpush2.msra.mxu0 0.0
    %1552 = vmatprep.subr.mxu0 0.0
    %1553 = vmatpush2.msra.mxu0 0.0
    %1554 = vmatprep.subr.mxu0 0.0
    %1555 = vmatpush2.msra.mxu0 0.0
    %1556 = vmatprep.mubr.f32.mxu0 0.0
    %1557 = vmatmul.mubr.f32.gmra.mxu0 %v1490
    %v1558 = vpop.f32.mrf.mxu0
    %v1559 = vadd.f32 %v1488, %v1558
    %v1560 = vpop.f32.mrf.mxu0
    %1561 = vdwg.mxu0
    %1562 = vst [vmem:[%s2] sm:$0xff] %v1559
    // Predicated region
    $region14: #{relationship_encoder_forward.1} parent=1 // pred_check
      _
    $region15: #{relationship_encoder_forward.1} parent=1 // pred_check_branch
      %1564 = sbr.rel (0) target = $region17
    $region16: #{relationship_encoder_forward.1} parent=1 // pred_region
      _
    $region17: #{relationship_encoder_forward.1} parent=1 // pred_fallthru
      _
    // Predicated region
    $region18: #{relationship_encoder_forward.1} parent=1 // pred_check
      _
    $region19: #{relationship_encoder_forward.1} parent=1 // pred_check_branch
      %1566 = sbr.rel (0) target = $region21
    $region20: #{relationship_encoder_forward.1} parent=1 // pred_region
      _
    $region21: #{relationship_encoder_forward.1} parent=1 // pred_fallthru
      _
    %1567 = vsyncpa [#allocation3], 1

</llo_original>
